<compile_context>
chip_gen: v7x
topology: tpu7x:2x2x1
jax: 0.10.0
libtpu: 0.0.40
codegen_flags: <defaults>
</compile_context>

<pallas_src>
import functools

import jax
import jax.numpy as jnp
import numpy as np
from jax.experimental import pallas as pl
from jax.experimental.pallas import tpu as pltpu

K = 7            # spatial-attention kernel size
PAD = K // 2     # padding = 3


def _round_up(v, m):
    return (v + m - 1) // m * m


def _pick_batch_block(n):
    """Batch a few images per grid step, but keep >= 2 steps (v7x megacore)."""
    nb = 1
    for cand in range(1, min(n, 8) + 1):
        if n % cand == 0 and n // cand >= 2:
            nb = cand
    return nb


def _cbam_kernel(x_ref, w1_ref, w2_ref, cexp_ref, wtap_ref,
                 max_sel_ref, avg_sel_ref, sexp_ref, o_ref, cmap_ref,
                 *, H, W, C, PAD, SEG, L, DOFF):
    Nb = x_ref.shape[0]
    WC = W * C
    NH = Nb * H

    x = x_ref[...].astype(jnp.float32)                      # (Nb, H, WC) lane-dense

    # ---------------- channel attention ----------------
    colsum = jnp.sum(x, axis=1)                             # (Nb, WC)
    # per-channel global mean via the 0/1 channel-selector map (VPU mul + lane reduce)
    pooled = jnp.sum(colsum[:, None, :] * cexp_ref[...][None, :, :],
                     axis=2) * (1.0 / (H * W))              # (Nb, C)
    # tiny MLP on the VPU (avoid M=1/ M=Nb MXU matmuls)
    h1 = jnp.maximum(
        jnp.sum(pooled[:, :, None] * w1_ref[...][None, :, :], axis=1), 0.0)   # (Nb, Cr)
    ca = jax.nn.sigmoid(
        jnp.sum(h1[:, :, None] * w2_ref[...][None, :, :], axis=1))            # (Nb, C)
    # tile the gate to the (w*C + c) lane layout and apply it lane-dense
    ca_tiled = jnp.sum(ca[:, :, None] * cexp_ref[...][None, :, :], axis=1)    # (Nb, WC)
    y = x * ca_tiled[:, None, :]                            # (Nb, H, WC)

    # ---------------- per-pixel channel max / mean ----------------
    # segmented max over each aligned group of C lanes via a lane-roll log-tree
    m = y
    cov = 1
    while cov < C:
        step = min(cov, C - cov)
        m = jnp.maximum(m, pltpu.roll(m, shift=WC - step, axis=2))
        cov += step
    y2 = y.reshape(NH, WC)
    m2 = m.reshape(NH, WC)
    # compress group max / mean and drop them straight into the padded conv-row
    # layout (max at lanes [PAD, PAD+W), avg at lanes [SEG+PAD, SEG+PAD+W)) on MXU
    rows = (jnp.dot(m2, max_sel_ref[...], preferred_element_type=jnp.float32) +
            jnp.dot(y2, avg_sel_ref[...], preferred_element_type=jnp.float32))  # (NH, L)

    # ---------------- padded, lane-concatenated conv map in VMEM ----------------
    cmap_ref[...] = jnp.zeros_like(cmap_ref)
    cmap_ref[:, pl.ds(DOFF, H), :] = rows.reshape(Nb, H, L)   # aligned full-lane store

    # ---------------- 7x7 spatial conv: sublane-offset rows + lane rolls ----------------
    # TODO(synk): for large H wrap the kh loop in lax.fori_loop(..., unroll=True)
    # to bound live ranges; at H=16 the fully unrolled form is fine.
    acc = jnp.zeros((Nb, H, L), jnp.float32)
    for kh in range(K):
        rkh = cmap_ref[:, pl.ds(DOFF - PAD + kh, H), :]       # (Nb, H, L)
        for kw in range(K):
            shifted = rkh if kw == 0 else pltpu.roll(rkh, shift=L - kw, axis=2)
            acc = acc + shifted * wtap_ref[kh * K + kw, :]    # per-tap weight row (L,)
    # add the two weight segments and broadcast the attention over the C lanes of
    # each pixel in a single MXU matmul, then sigmoid (EUP).
    sa = jax.nn.sigmoid(
        jnp.dot(acc.reshape(NH, L), sexp_ref[...],
                preferred_element_type=jnp.float32)).reshape(Nb, H, WC)

    o_ref[...] = (y * sa).astype(o_ref.dtype)                 # lane-dense store


def cbam(x, w1, w2, wsa_flat, *, batch_block=None):
    """x: (N, H, W, C) NHWC; w1: (C, C//r); w2: (C//r, C); wsa_flat: (2*K*K,)."""
    N, H, W, C = x.shape
    Cr = w1.shape[1]
    WC = W * C

    Wpad = W + 2 * PAD
    SEG = Wpad                                   # lane offset of the avg segment
    L = max(128, _round_up(2 * Wpad, 128))       # conv-row lane width (roll-safe)
    DOFF = _round_up(PAD, 8)                     # aligned sublane offset of data rows
    R_SCR = _round_up(DOFF + H + PAD, 8)         # scratch rows

    Nb = batch_block if batch_block is not None else _pick_batch_block(N)
    assert N % Nb == 0

    # ---- structural 0/1 selector constants (shape-only, built once on host) ----
    cexp = jnp.asarray(np.tile(np.eye(C, dtype=np.float32), (1, W)))    # (C, WC)

    max_sel = np.zeros((WC, L), np.float32)                             # (WC, L)
    max_sel[np.arange(W) * C, PAD + np.arange(W)] = 1.0
    avg_sel = np.zeros((WC, L), np.float32)                             # (WC, L)
    for w in range(W):
        avg_sel[w * C:(w + 1) * C, SEG + PAD + w] = 1.0 / C
    sexp = np.zeros((L, WC), np.float32)                                # (L, WC)
    for w in range(W):
        sexp[w, w * C:(w + 1) * C] = 1.0
        sexp[SEG + w, w * C:(w + 1) * C] = 1.0
    max_sel = jnp.asarray(max_sel)
    avg_sel = jnp.asarray(avg_sel)
    sexp = jnp.asarray(sexp)

    # ---- per-tap weight rows (hoisted out of the kernel's tap loop) ----
    wsa2 = wsa_flat.reshape(2, K, K).astype(jnp.float32)
    lane = jnp.arange(L)
    mask_max = (lane < W).astype(jnp.float32)[None, :]
    mask_avg = ((lane >= SEG) & (lane < SEG + W)).astype(jnp.float32)[None, :]
    wtap = (wsa2[0].reshape(K * K, 1) * mask_max +
            wsa2[1].reshape(K * K, 1) * mask_avg)                       # (K*K, L)

    x2d = x.reshape(N, H, WC)                    # collapse (W, C) onto the lane axis

    kernel = functools.partial(_cbam_kernel, H=H, W=W, C=C,
                               PAD=PAD, SEG=SEG, L=L, DOFF=DOFF)

    out2d = pl.pallas_call(
        kernel,
        out_shape=jax.ShapeDtypeStruct((N, H, WC), x.dtype),
        grid_spec=pltpu.PrefetchScalarGridSpec(
            num_scalar_prefetch=0,
            grid=(N // Nb,),
            in_specs=[
                pl.BlockSpec((Nb, H, WC), lambda n: (n, 0, 0)),   # x (lane-dense)
                pl.BlockSpec((C, Cr), lambda n: (0, 0)),          # w1
                pl.BlockSpec((Cr, C), lambda n: (0, 0)),          # w2
                pl.BlockSpec((C, WC), lambda n: (0, 0)),          # cexp
                pl.BlockSpec((K * K, L), lambda n: (0, 0)),       # per-tap weights
                pl.BlockSpec((WC, L), lambda n: (0, 0)),          # max_sel
                pl.BlockSpec((WC, L), lambda n: (0, 0)),          # avg_sel
                pl.BlockSpec((L, WC), lambda n: (0, 0)),          # sexp
            ],
            out_specs=pl.BlockSpec((Nb, H, WC), lambda n: (n, 0, 0)),
            scratch_shapes=[pltpu.VMEM((Nb, R_SCR, L), jnp.float32)],
        ),
        compiler_params=pltpu.CompilerParams(
            dimension_semantics=("parallel",),
            vmem_limit_bytes=32 * 1024 * 1024),
    )(x2d, w1, w2, cexp, wtap, max_sel, avg_sel, sexp)

    return out2d.reshape(N, H, W, C)


def cbam_ref(x, w1, w2, wsa_flat):
    """Pure-JAX reference (NHWC) matching the PyTorch module semantics."""
    N, H, W, C = x.shape
    pooled = jnp.mean(x, axis=(1, 2))                      # (N, C)
    h1 = jnp.maximum(pooled @ w1, 0.0)
    ca = jax.nn.sigmoid(h1 @ w2)                           # (N, C)
    x = x * ca[:, None, None, :]
    max_map = jnp.max(x, axis=-1)                          # (N, H, W)
    avg_map = jnp.mean(x, axis=-1)
    stacked = jnp.stack([max_map, avg_map], axis=1)        # (N, 2, H, W)
    wsa = wsa_flat.reshape(1, 2, K, K)
    sa = jax.lax.conv_general_dilated(
        stacked, wsa, window_strides=(1, 1),
        padding=[(PAD, PAD), (PAD, PAD)],
        dimension_numbers=("NCHW", "OIHW", "NCHW"))
    sa = jax.nn.sigmoid(sa[:, 0])                          # (N, H, W)
    return x * sa[:, :, :, None]


if __name__ == "__main__":
    key = jax.random.PRNGKey(0)
    N, C, H, W = 2, 16, 16, 16
    reduction_ratio = 4
    Cr = C // reduction_ratio

    k1, k2, k3, k4 = jax.random.split(key, 4)
    # x in NHWC; the equivalent torch input would be NCHW (2, 16, 16, 16)
    x = jax.random.normal(k1, (N, H, W, C), jnp.float32)
    w1 = 0.2 * jax.random.normal(k2, (C, Cr), jnp.float32)        # 1x1 conv: C -> C/r
    w2 = 0.2 * jax.random.normal(k3, (Cr, C), jnp.float32)        # 1x1 conv: C/r -> C
    wsa = 0.1 * jax.random.normal(k4, (2 * K * K,), jnp.float32)  # 7x7 conv: 2 -> 1

    out = cbam(x, w1, w2, wsa)
    out = jax.block_until_ready(out)

    ref = cbam_ref(x, w1, w2, wsa)
    assert np.allclose(np.asarray(out), np.asarray(ref), rtol=2e-3, atol=2e-3), \
        "Pallas CBAM output does not match JAX reference"
    print("KERNEL_OK")
</pallas_src>

<mosaic_0001>
module attributes {stable_mosaic.version = 11 : i64} {
  func.func @_cbam_kernel(%arg0: i32, %arg1: memref<1x16x256xf32, #tpu.memory_space<vmem>>, %arg2: memref<16x4xf32, #tpu.memory_space<vmem>>, %arg3: memref<4x16xf32, #tpu.memory_space<vmem>>, %arg4: memref<16x256xf32, #tpu.memory_space<vmem>>, %arg5: memref<49x128xf32, #tpu.memory_space<vmem>>, %arg6: memref<256x128xf32, #tpu.memory_space<vmem>>, %arg7: memref<256x128xf32, #tpu.memory_space<vmem>>, %arg8: memref<128x256xf32, #tpu.memory_space<vmem>>, %arg9: memref<1x16x256xf32, #tpu.memory_space<vmem>>, %arg10: memref<1x32x128xf32, #tpu.memory_space<vmem>>) attributes {dimension_semantics = [#tpu.dimension_semantics<parallel>], iteration_bounds = array<i64: 2>, scalar_prefetch = 0 : i64, scratch_operands = 1 : i64, tpu.core_type = #tpu.core_type<tc>, window_params = [{transform_indices = @transform_0, window_bounds = array<i64: 1, 16, 256>}, {pipeline_mode = #tpu.pipeline_mode<synchronous>, transform_indices = @transform_1, window_bounds = array<i64: 16, 4>}, {pipeline_mode = #tpu.pipeline_mode<synchronous>, transform_indices = @transform_2, window_bounds = array<i64: 4, 16>}, {pipeline_mode = #tpu.pipeline_mode<synchronous>, transform_indices = @transform_3, window_bounds = array<i64: 16, 256>}, {pipeline_mode = #tpu.pipeline_mode<synchronous>, transform_indices = @transform_4, window_bounds = array<i64: 49, 128>}, {pipeline_mode = #tpu.pipeline_mode<synchronous>, transform_indices = @transform_5, window_bounds = array<i64: 256, 128>}, {pipeline_mode = #tpu.pipeline_mode<synchronous>, transform_indices = @transform_6, window_bounds = array<i64: 256, 128>}, {pipeline_mode = #tpu.pipeline_mode<synchronous>, transform_indices = @transform_7, window_bounds = array<i64: 128, 256>}, {transform_indices = @transform_8, window_bounds = array<i64: 1, 16, 256>}]} {
    %c0 = arith.constant 0 : index
    %c0_0 = arith.constant 0 : index
    %c0_1 = arith.constant 0 : index
    %0 = vector.load %arg1[%c0, %c0_0, %c0_1] : memref<1x16x256xf32, #tpu.memory_space<vmem>>, vector<1x16x256xf32>
    %cst = arith.constant dense<0.000000e+00> : vector<1x256xf32>
    %1 = vector.multi_reduction <add>, %0, %cst [1] : vector<1x16x256xf32> to vector<1x256xf32>
    %2 = vector.shape_cast %1 : vector<1x256xf32> to vector<1x1x256xf32>
    %c0_2 = arith.constant 0 : index
    %c0_3 = arith.constant 0 : index
    %3 = vector.load %arg4[%c0_2, %c0_3] : memref<16x256xf32, #tpu.memory_space<vmem>>, vector<16x256xf32>
    %4 = vector.shape_cast %3 : vector<16x256xf32> to vector<1x16x256xf32>
    %5 = vector.broadcast %2 : vector<1x1x256xf32> to vector<1x16x256xf32>
    %6 = arith.mulf %5, %4 : vector<1x16x256xf32>
    %cst_4 = arith.constant dense<0.000000e+00> : vector<1x16xf32>
    %7 = vector.multi_reduction <add>, %6, %cst_4 [2] : vector<1x16x256xf32> to vector<1x16xf32>
    %cst_5 = arith.constant 3.906250e-03 : f32
    %8 = vector.broadcast %cst_5 : f32 to vector<1x16xf32>
    %9 = arith.mulf %7, %8 : vector<1x16xf32>
    %10 = vector.shape_cast %9 : vector<1x16xf32> to vector<1x16x1xf32>
    %c0_6 = arith.constant 0 : index
    %c0_7 = arith.constant 0 : index
    %11 = vector.load %arg2[%c0_6, %c0_7] : memref<16x4xf32, #tpu.memory_space<vmem>>, vector<16x4xf32>
    %12 = vector.shape_cast %11 : vector<16x4xf32> to vector<1x16x4xf32>
    %13 = vector.broadcast %10 : vector<1x16x1xf32> to vector<1x16x4xf32>
    %14 = arith.mulf %13, %12 : vector<1x16x4xf32>
    %cst_8 = arith.constant dense<0.000000e+00> : vector<1x4xf32>
    %15 = vector.multi_reduction <add>, %14, %cst_8 [1] : vector<1x16x4xf32> to vector<1x4xf32>
    %cst_9 = arith.constant 0.000000e+00 : f32
    %16 = vector.broadcast %cst_9 : f32 to vector<1x4xf32>
    %17 = arith.maximumf %15, %16 : vector<1x4xf32>
    %18 = vector.shape_cast %17 : vector<1x4xf32> to vector<1x4x1xf32>
    %c0_10 = arith.constant 0 : index
    %c0_11 = arith.constant 0 : index
    %19 = vector.load %arg3[%c0_10, %c0_11] : memref<4x16xf32, #tpu.memory_space<vmem>>, vector<4x16xf32>
    %20 = vector.shape_cast %19 : vector<4x16xf32> to vector<1x4x16xf32>
    %21 = vector.broadcast %18 : vector<1x4x1xf32> to vector<1x4x16xf32>
    %22 = arith.mulf %21, %20 : vector<1x4x16xf32>
    %cst_12 = arith.constant dense<0.000000e+00> : vector<1x16xf32>
    %23 = vector.multi_reduction <add>, %22, %cst_12 [1] : vector<1x4x16xf32> to vector<1x16xf32>
    %24 = arith.negf %23 : vector<1x16xf32>
    %25 = math.exp %24 : vector<1x16xf32>
    %cst_13 = arith.constant 1.000000e+00 : f32
    %26 = vector.broadcast %cst_13 : f32 to vector<1x16xf32>
    %27 = arith.addf %26, %25 : vector<1x16xf32>
    %28 = arith.divf %26, %27 : vector<1x16xf32>
    %29 = vector.shape_cast %28 : vector<1x16xf32> to vector<1x16x1xf32>
    %c0_14 = arith.constant 0 : index
    %c0_15 = arith.constant 0 : index
    %30 = vector.load %arg4[%c0_14, %c0_15] : memref<16x256xf32, #tpu.memory_space<vmem>>, vector<16x256xf32>
    %31 = vector.shape_cast %30 : vector<16x256xf32> to vector<1x16x256xf32>
    %32 = vector.broadcast %29 : vector<1x16x1xf32> to vector<1x16x256xf32>
    %33 = arith.mulf %32, %31 : vector<1x16x256xf32>
    %cst_16 = arith.constant dense<0.000000e+00> : vector<1x256xf32>
    %34 = vector.multi_reduction <add>, %33, %cst_16 [1] : vector<1x16x256xf32> to vector<1x256xf32>
    %35 = vector.shape_cast %34 : vector<1x256xf32> to vector<1x1x256xf32>
    %36 = vector.broadcast %35 : vector<1x1x256xf32> to vector<1x16x256xf32>
    %37 = arith.mulf %0, %36 : vector<1x16x256xf32>
    %c255_i32 = arith.constant 255 : i32
    %38 = tpu.dynamic_rotate %37 by %c255_i32 dim 2 : vector<1x16x256xf32>, i32 -> vector<1x16x256xf32>
    %39 = arith.maximumf %37, %38 : vector<1x16x256xf32>
    %c254_i32 = arith.constant 254 : i32
    %40 = tpu.dynamic_rotate %39 by %c254_i32 dim 2 : vector<1x16x256xf32>, i32 -> vector<1x16x256xf32>
    %41 = arith.maximumf %39, %40 : vector<1x16x256xf32>
    %c252_i32 = arith.constant 252 : i32
    %42 = tpu.dynamic_rotate %41 by %c252_i32 dim 2 : vector<1x16x256xf32>, i32 -> vector<1x16x256xf32>
    %43 = arith.maximumf %41, %42 : vector<1x16x256xf32>
    %c248_i32 = arith.constant 248 : i32
    %44 = tpu.dynamic_rotate %43 by %c248_i32 dim 2 : vector<1x16x256xf32>, i32 -> vector<1x16x256xf32>
    %45 = arith.maximumf %43, %44 : vector<1x16x256xf32>
    %46 = vector.shape_cast %37 : vector<1x16x256xf32> to vector<16x256xf32>
    %47 = vector.shape_cast %45 : vector<1x16x256xf32> to vector<16x256xf32>
    %c0_17 = arith.constant 0 : index
    %c0_18 = arith.constant 0 : index
    %48 = vector.load %arg6[%c0_17, %c0_18] : memref<256x128xf32, #tpu.memory_space<vmem>>, vector<256x128xf32>
    %cst_19 = arith.constant dense<0.000000e+00> : vector<16x128xf32>
    %49 = tpu.matmul %47, %48, %cst_19 {dimension_numbers = #tpu.dot_dimension_numbers<[1], [0], [0], [1], [0, 0, 1, 1], [], []>} : vector<16x256xf32>, vector<256x128xf32>, vector<16x128xf32> -> vector<16x128xf32>
    %c0_20 = arith.constant 0 : index
    %c0_21 = arith.constant 0 : index
    %50 = vector.load %arg7[%c0_20, %c0_21] : memref<256x128xf32, #tpu.memory_space<vmem>>, vector<256x128xf32>
    %cst_22 = arith.constant dense<0.000000e+00> : vector<16x128xf32>
    %51 = tpu.matmul %46, %50, %cst_22 {dimension_numbers = #tpu.dot_dimension_numbers<[1], [0], [0], [1], [0, 0, 1, 1], [], []>} : vector<16x256xf32>, vector<256x128xf32>, vector<16x128xf32> -> vector<16x128xf32>
    %52 = arith.addf %49, %51 : vector<16x128xf32>
    %cst_23 = arith.constant 0.000000e+00 : f32
    %53 = vector.broadcast %cst_23 : f32 to vector<1x32x128xf32>
    %c0_24 = arith.constant 0 : index
    %c0_25 = arith.constant 0 : index
    %c0_26 = arith.constant 0 : index
    %54 = vector.load %arg10[%c0_24, %c0_25, %c0_26] : memref<1x32x128xf32, #tpu.memory_space<vmem>>, vector<1x32x128xf32>
    tpu.vector_store %arg10[%c0_24, %c0_25, %c0_26], %53 {strides = array<i32>} : memref<1x32x128xf32, #tpu.memory_space<vmem>>, vector<1x32x128xf32>,
    %55 = vector.shape_cast %52 : vector<16x128xf32> to vector<1x16x128xf32>
    %c0_27 = arith.constant 0 : index
    %c8 = arith.constant 8 : index
    %c0_28 = arith.constant 0 : index
    %56 = vector.load %arg10[%c0_27, %c8, %c0_28] : memref<1x32x128xf32, #tpu.memory_space<vmem>>, vector<1x16x128xf32>
    tpu.vector_store %arg10[%c0_27, %c8, %c0_28], %55 {strides = array<i32>} : memref<1x32x128xf32, #tpu.memory_space<vmem>>, vector<1x16x128xf32>,
    %cst_29 = arith.constant 0.000000e+00 : f32
    %57 = vector.broadcast %cst_29 : f32 to vector<1x16x128xf32>
    %c0_30 = arith.constant 0 : index
    %c5 = arith.constant 5 : index
    %c0_31 = arith.constant 0 : index
    %58 = vector.load %arg10[%c0_30, %c5, %c0_31] : memref<1x32x128xf32, #tpu.memory_space<vmem>>, vector<1x16x128xf32>
    %c0_32 = arith.constant 0 : index
    %c0_33 = arith.constant 0 : index
    %59 = vector.load %arg5[%c0_32, %c0_33] : memref<49x128xf32, #tpu.memory_space<vmem>>, vector<1x128xf32>
    %60 = vector.shape_cast %59 : vector<1x128xf32> to vector<128xf32>
    %61 = vector.shape_cast %60 : vector<128xf32> to vector<1x1x128xf32>
    %62 = vector.broadcast %61 : vector<1x1x128xf32> to vector<1x16x128xf32>
    %63 = arith.mulf %58, %62 : vector<1x16x128xf32>
    %64 = arith.addf %57, %63 : vector<1x16x128xf32>
    %c127_i32 = arith.constant 127 : i32
    %65 = tpu.dynamic_rotate %58 by %c127_i32 dim 2 : vector<1x16x128xf32>, i32 -> vector<1x16x128xf32>
    %c1 = arith.constant 1 : index
    %c0_34 = arith.constant 0 : index
    %66 = vector.load %arg5[%c1, %c0_34] : memref<49x128xf32, #tpu.memory_space<vmem>>, vector<1x128xf32>
    %67 = vector.shape_cast %66 : vector<1x128xf32> to vector<128xf32>
    %68 = vector.shape_cast %67 : vector<128xf32> to vector<1x1x128xf32>
    %69 = vector.broadcast %68 : vector<1x1x128xf32> to vector<1x16x128xf32>
    %70 = arith.mulf %65, %69 : vector<1x16x128xf32>
    %71 = arith.addf %64, %70 : vector<1x16x128xf32>
    %c126_i32 = arith.constant 126 : i32
    %72 = tpu.dynamic_rotate %58 by %c126_i32 dim 2 : vector<1x16x128xf32>, i32 -> vector<1x16x128xf32>
    %c2 = arith.constant 2 : index
    %c0_35 = arith.constant 0 : index
    %73 = vector.load %arg5[%c2, %c0_35] : memref<49x128xf32, #tpu.memory_space<vmem>>, vector<1x128xf32>
    %74 = vector.shape_cast %73 : vector<1x128xf32> to vector<128xf32>
    %75 = vector.shape_cast %74 : vector<128xf32> to vector<1x1x128xf32>
    %76 = vector.broadcast %75 : vector<1x1x128xf32> to vector<1x16x128xf32>
    %77 = arith.mulf %72, %76 : vector<1x16x128xf32>
    %78 = arith.addf %71, %77 : vector<1x16x128xf32>
    %c125_i32 = arith.constant 125 : i32
    %79 = tpu.dynamic_rotate %58 by %c125_i32 dim 2 : vector<1x16x128xf32>, i32 -> vector<1x16x128xf32>
    %c3 = arith.constant 3 : index
    %c0_36 = arith.constant 0 : index
    %80 = vector.load %arg5[%c3, %c0_36] : memref<49x128xf32, #tpu.memory_space<vmem>>, vector<1x128xf32>
    %81 = vector.shape_cast %80 : vector<1x128xf32> to vector<128xf32>
    %82 = vector.shape_cast %81 : vector<128xf32> to vector<1x1x128xf32>
    %83 = vector.broadcast %82 : vector<1x1x128xf32> to vector<1x16x128xf32>
    %84 = arith.mulf %79, %83 : vector<1x16x128xf32>
    %85 = arith.addf %78, %84 : vector<1x16x128xf32>
    %c124_i32 = arith.constant 124 : i32
    %86 = tpu.dynamic_rotate %58 by %c124_i32 dim 2 : vector<1x16x128xf32>, i32 -> vector<1x16x128xf32>
    %c4 = arith.constant 4 : index
    %c0_37 = arith.constant 0 : index
    %87 = vector.load %arg5[%c4, %c0_37] : memref<49x128xf32, #tpu.memory_space<vmem>>, vector<1x128xf32>
    %88 = vector.shape_cast %87 : vector<1x128xf32> to vector<128xf32>
    %89 = vector.shape_cast %88 : vector<128xf32> to vector<1x1x128xf32>
    %90 = vector.broadcast %89 : vector<1x1x128xf32> to vector<1x16x128xf32>
    %91 = arith.mulf %86, %90 : vector<1x16x128xf32>
    %92 = arith.addf %85, %91 : vector<1x16x128xf32>
    %c123_i32 = arith.constant 123 : i32
    %93 = tpu.dynamic_rotate %58 by %c123_i32 dim 2 : vector<1x16x128xf32>, i32 -> vector<1x16x128xf32>
    %c5_38 = arith.constant 5 : index
    %c0_39 = arith.constant 0 : index
    %94 = vector.load %arg5[%c5_38, %c0_39] : memref<49x128xf32, #tpu.memory_space<vmem>>, vector<1x128xf32>
    %95 = vector.shape_cast %94 : vector<1x128xf32> to vector<128xf32>
    %96 = vector.shape_cast %95 : vector<128xf32> to vector<1x1x128xf32>
    %97 = vector.broadcast %96 : vector<1x1x128xf32> to vector<1x16x128xf32>
    %98 = arith.mulf %93, %97 : vector<1x16x128xf32>
    %99 = arith.addf %92, %98 : vector<1x16x128xf32>
    %c122_i32 = arith.constant 122 : i32
    %100 = tpu.dynamic_rotate %58 by %c122_i32 dim 2 : vector<1x16x128xf32>, i32 -> vector<1x16x128xf32>
    %c6 = arith.constant 6 : index
    %c0_40 = arith.constant 0 : index
    %101 = vector.load %arg5[%c6, %c0_40] : memref<49x128xf32, #tpu.memory_space<vmem>>, vector<1x128xf32>
    %102 = vector.shape_cast %101 : vector<1x128xf32> to vector<128xf32>
    %103 = vector.shape_cast %102 : vector<128xf32> to vector<1x1x128xf32>
    %104 = vector.broadcast %103 : vector<1x1x128xf32> to vector<1x16x128xf32>
    %105 = arith.mulf %100, %104 : vector<1x16x128xf32>
    %106 = arith.addf %99, %105 : vector<1x16x128xf32>
    %c0_41 = arith.constant 0 : index
    %c6_42 = arith.constant 6 : index
    %c0_43 = arith.constant 0 : index
    %107 = vector.load %arg10[%c0_41, %c6_42, %c0_43] : memref<1x32x128xf32, #tpu.memory_space<vmem>>, vector<1x16x128xf32>
    %c7 = arith.constant 7 : index
    %c0_44 = arith.constant 0 : index
    %108 = vector.load %arg5[%c7, %c0_44] : memref<49x128xf32, #tpu.memory_space<vmem>>, vector<1x128xf32>
    %109 = vector.shape_cast %108 : vector<1x128xf32> to vector<128xf32>
    %110 = vector.shape_cast %109 : vector<128xf32> to vector<1x1x128xf32>
    %111 = vector.broadcast %110 : vector<1x1x128xf32> to vector<1x16x128xf32>
    %112 = arith.mulf %107, %111 : vector<1x16x128xf32>
    %113 = arith.addf %106, %112 : vector<1x16x128xf32>
    %c127_i32_45 = arith.constant 127 : i32
    %114 = tpu.dynamic_rotate %107 by %c127_i32_45 dim 2 : vector<1x16x128xf32>, i32 -> vector<1x16x128xf32>
    %c8_46 = arith.constant 8 : index
    %c0_47 = arith.constant 0 : index
    %115 = vector.load %arg5[%c8_46, %c0_47] : memref<49x128xf32, #tpu.memory_space<vmem>>, vector<1x128xf32>
    %116 = vector.shape_cast %115 : vector<1x128xf32> to vector<128xf32>
    %117 = vector.shape_cast %116 : vector<128xf32> to vector<1x1x128xf32>
    %118 = vector.broadcast %117 : vector<1x1x128xf32> to vector<1x16x128xf32>
    %119 = arith.mulf %114, %118 : vector<1x16x128xf32>
    %120 = arith.addf %113, %119 : vector<1x16x128xf32>
    %c126_i32_48 = arith.constant 126 : i32
    %121 = tpu.dynamic_rotate %107 by %c126_i32_48 dim 2 : vector<1x16x128xf32>, i32 -> vector<1x16x128xf32>
    %c9 = arith.constant 9 : index
    %c0_49 = arith.constant 0 : index
    %122 = vector.load %arg5[%c9, %c0_49] : memref<49x128xf32, #tpu.memory_space<vmem>>, vector<1x128xf32>
    %123 = vector.shape_cast %122 : vector<1x128xf32> to vector<128xf32>
    %124 = vector.shape_cast %123 : vector<128xf32> to vector<1x1x128xf32>
    %125 = vector.broadcast %124 : vector<1x1x128xf32> to vector<1x16x128xf32>
    %126 = arith.mulf %121, %125 : vector<1x16x128xf32>
    %127 = arith.addf %120, %126 : vector<1x16x128xf32>
    %c125_i32_50 = arith.constant 125 : i32
    %128 = tpu.dynamic_rotate %107 by %c125_i32_50 dim 2 : vector<1x16x128xf32>, i32 -> vector<1x16x128xf32>
    %c10 = arith.constant 10 : index
    %c0_51 = arith.constant 0 : index
    %129 = vector.load %arg5[%c10, %c0_51] : memref<49x128xf32, #tpu.memory_space<vmem>>, vector<1x128xf32>
    %130 = vector.shape_cast %129 : vector<1x128xf32> to vector<128xf32>
    %131 = vector.shape_cast %130 : vector<128xf32> to vector<1x1x128xf32>
    %132 = vector.broadcast %131 : vector<1x1x128xf32> to vector<1x16x128xf32>
    %133 = arith.mulf %128, %132 : vector<1x16x128xf32>
    %134 = arith.addf %127, %133 : vector<1x16x128xf32>
    %c124_i32_52 = arith.constant 124 : i32
    %135 = tpu.dynamic_rotate %107 by %c124_i32_52 dim 2 : vector<1x16x128xf32>, i32 -> vector<1x16x128xf32>
    %c11 = arith.constant 11 : index
    %c0_53 = arith.constant 0 : index
    %136 = vector.load %arg5[%c11, %c0_53] : memref<49x128xf32, #tpu.memory_space<vmem>>, vector<1x128xf32>
    %137 = vector.shape_cast %136 : vector<1x128xf32> to vector<128xf32>
    %138 = vector.shape_cast %137 : vector<128xf32> to vector<1x1x128xf32>
    %139 = vector.broadcast %138 : vector<1x1x128xf32> to vector<1x16x128xf32>
    %140 = arith.mulf %135, %139 : vector<1x16x128xf32>
    %141 = arith.addf %134, %140 : vector<1x16x128xf32>
    %c123_i32_54 = arith.constant 123 : i32
    %142 = tpu.dynamic_rotate %107 by %c123_i32_54 dim 2 : vector<1x16x128xf32>, i32 -> vector<1x16x128xf32>
    %c12 = arith.constant 12 : index
    %c0_55 = arith.constant 0 : index
    %143 = vector.load %arg5[%c12, %c0_55] : memref<49x128xf32, #tpu.memory_space<vmem>>, vector<1x128xf32>
    %144 = vector.shape_cast %143 : vector<1x128xf32> to vector<128xf32>
    %145 = vector.shape_cast %144 : vector<128xf32> to vector<1x1x128xf32>
    %146 = vector.broadcast %145 : vector<1x1x128xf32> to vector<1x16x128xf32>
    %147 = arith.mulf %142, %146 : vector<1x16x128xf32>
    %148 = arith.addf %141, %147 : vector<1x16x128xf32>
    %c122_i32_56 = arith.constant 122 : i32
    %149 = tpu.dynamic_rotate %107 by %c122_i32_56 dim 2 : vector<1x16x128xf32>, i32 -> vector<1x16x128xf32>
    %c13 = arith.constant 13 : index
    %c0_57 = arith.constant 0 : index
    %150 = vector.load %arg5[%c13, %c0_57] : memref<49x128xf32, #tpu.memory_space<vmem>>, vector<1x128xf32>
    %151 = vector.shape_cast %150 : vector<1x128xf32> to vector<128xf32>
    %152 = vector.shape_cast %151 : vector<128xf32> to vector<1x1x128xf32>
    %153 = vector.broadcast %152 : vector<1x1x128xf32> to vector<1x16x128xf32>
    %154 = arith.mulf %149, %153 : vector<1x16x128xf32>
    %155 = arith.addf %148, %154 : vector<1x16x128xf32>
    %c0_58 = arith.constant 0 : index
    %c7_59 = arith.constant 7 : index
    %c0_60 = arith.constant 0 : index
    %156 = vector.load %arg10[%c0_58, %c7_59, %c0_60] : memref<1x32x128xf32, #tpu.memory_space<vmem>>, vector<1x16x128xf32>
    %c14 = arith.constant 14 : index
    %c0_61 = arith.constant 0 : index
    %157 = vector.load %arg5[%c14, %c0_61] : memref<49x128xf32, #tpu.memory_space<vmem>>, vector<1x128xf32>
    %158 = vector.shape_cast %157 : vector<1x128xf32> to vector<128xf32>
    %159 = vector.shape_cast %158 : vector<128xf32> to vector<1x1x128xf32>
    %160 = vector.broadcast %159 : vector<1x1x128xf32> to vector<1x16x128xf32>
    %161 = arith.mulf %156, %160 : vector<1x16x128xf32>
    %162 = arith.addf %155, %161 : vector<1x16x128xf32>
    %c127_i32_62 = arith.constant 127 : i32
    %163 = tpu.dynamic_rotate %156 by %c127_i32_62 dim 2 : vector<1x16x128xf32>, i32 -> vector<1x16x128xf32>
    %c15 = arith.constant 15 : index
    %c0_63 = arith.constant 0 : index
    %164 = vector.load %arg5[%c15, %c0_63] : memref<49x128xf32, #tpu.memory_space<vmem>>, vector<1x128xf32>
    %165 = vector.shape_cast %164 : vector<1x128xf32> to vector<128xf32>
    %166 = vector.shape_cast %165 : vector<128xf32> to vector<1x1x128xf32>
    %167 = vector.broadcast %166 : vector<1x1x128xf32> to vector<1x16x128xf32>
    %168 = arith.mulf %163, %167 : vector<1x16x128xf32>
    %169 = arith.addf %162, %168 : vector<1x16x128xf32>
    %c126_i32_64 = arith.constant 126 : i32
    %170 = tpu.dynamic_rotate %156 by %c126_i32_64 dim 2 : vector<1x16x128xf32>, i32 -> vector<1x16x128xf32>
    %c16 = arith.constant 16 : index
    %c0_65 = arith.constant 0 : index
    %171 = vector.load %arg5[%c16, %c0_65] : memref<49x128xf32, #tpu.memory_space<vmem>>, vector<1x128xf32>
    %172 = vector.shape_cast %171 : vector<1x128xf32> to vector<128xf32>
    %173 = vector.shape_cast %172 : vector<128xf32> to vector<1x1x128xf32>
    %174 = vector.broadcast %173 : vector<1x1x128xf32> to vector<1x16x128xf32>
    %175 = arith.mulf %170, %174 : vector<1x16x128xf32>
    %176 = arith.addf %169, %175 : vector<1x16x128xf32>
    %c125_i32_66 = arith.constant 125 : i32
    %177 = tpu.dynamic_rotate %156 by %c125_i32_66 dim 2 : vector<1x16x128xf32>, i32 -> vector<1x16x128xf32>
    %c17 = arith.constant 17 : index
    %c0_67 = arith.constant 0 : index
    %178 = vector.load %arg5[%c17, %c0_67] : memref<49x128xf32, #tpu.memory_space<vmem>>, vector<1x128xf32>
    %179 = vector.shape_cast %178 : vector<1x128xf32> to vector<128xf32>
    %180 = vector.shape_cast %179 : vector<128xf32> to vector<1x1x128xf32>
    %181 = vector.broadcast %180 : vector<1x1x128xf32> to vector<1x16x128xf32>
    %182 = arith.mulf %177, %181 : vector<1x16x128xf32>
    %183 = arith.addf %176, %182 : vector<1x16x128xf32>
    %c124_i32_68 = arith.constant 124 : i32
    %184 = tpu.dynamic_rotate %156 by %c124_i32_68 dim 2 : vector<1x16x128xf32>, i32 -> vector<1x16x128xf32>
    %c18 = arith.constant 18 : index
    %c0_69 = arith.constant 0 : index
    %185 = vector.load %arg5[%c18, %c0_69] : memref<49x128xf32, #tpu.memory_space<vmem>>, vector<1x128xf32>
    %186 = vector.shape_cast %185 : vector<1x128xf32> to vector<128xf32>
    %187 = vector.shape_cast %186 : vector<128xf32> to vector<1x1x128xf32>
    %188 = vector.broadcast %187 : vector<1x1x128xf32> to vector<1x16x128xf32>
    %189 = arith.mulf %184, %188 : vector<1x16x128xf32>
    %190 = arith.addf %183, %189 : vector<1x16x128xf32>
    %c123_i32_70 = arith.constant 123 : i32
    %191 = tpu.dynamic_rotate %156 by %c123_i32_70 dim 2 : vector<1x16x128xf32>, i32 -> vector<1x16x128xf32>
    %c19 = arith.constant 19 : index
    %c0_71 = arith.constant 0 : index
    %192 = vector.load %arg5[%c19, %c0_71] : memref<49x128xf32, #tpu.memory_space<vmem>>, vector<1x128xf32>
    %193 = vector.shape_cast %192 : vector<1x128xf32> to vector<128xf32>
    %194 = vector.shape_cast %193 : vector<128xf32> to vector<1x1x128xf32>
    %195 = vector.broadcast %194 : vector<1x1x128xf32> to vector<1x16x128xf32>
    %196 = arith.mulf %191, %195 : vector<1x16x128xf32>
    %197 = arith.addf %190, %196 : vector<1x16x128xf32>
    %c122_i32_72 = arith.constant 122 : i32
    %198 = tpu.dynamic_rotate %156 by %c122_i32_72 dim 2 : vector<1x16x128xf32>, i32 -> vector<1x16x128xf32>
    %c20 = arith.constant 20 : index
    %c0_73 = arith.constant 0 : index
    %199 = vector.load %arg5[%c20, %c0_73] : memref<49x128xf32, #tpu.memory_space<vmem>>, vector<1x128xf32>
    %200 = vector.shape_cast %199 : vector<1x128xf32> to vector<128xf32>
    %201 = vector.shape_cast %200 : vector<128xf32> to vector<1x1x128xf32>
    %202 = vector.broadcast %201 : vector<1x1x128xf32> to vector<1x16x128xf32>
    %203 = arith.mulf %198, %202 : vector<1x16x128xf32>
    %204 = arith.addf %197, %203 : vector<1x16x128xf32>
    %c0_74 = arith.constant 0 : index
    %c8_75 = arith.constant 8 : index
    %c0_76 = arith.constant 0 : index
    %205 = vector.load %arg10[%c0_74, %c8_75, %c0_76] : memref<1x32x128xf32, #tpu.memory_space<vmem>>, vector<1x16x128xf32>
    %c21 = arith.constant 21 : index
    %c0_77 = arith.constant 0 : index
    %206 = vector.load %arg5[%c21, %c0_77] : memref<49x128xf32, #tpu.memory_space<vmem>>, vector<1x128xf32>
    %207 = vector.shape_cast %206 : vector<1x128xf32> to vector<128xf32>
    %208 = vector.shape_cast %207 : vector<128xf32> to vector<1x1x128xf32>
    %209 = vector.broadcast %208 : vector<1x1x128xf32> to vector<1x16x128xf32>
    %210 = arith.mulf %205, %209 : vector<1x16x128xf32>
    %211 = arith.addf %204, %210 : vector<1x16x128xf32>
    %c127_i32_78 = arith.constant 127 : i32
    %212 = tpu.dynamic_rotate %205 by %c127_i32_78 dim 2 : vector<1x16x128xf32>, i32 -> vector<1x16x128xf32>
    %c22 = arith.constant 22 : index
    %c0_79 = arith.constant 0 : index
    %213 = vector.load %arg5[%c22, %c0_79] : memref<49x128xf32, #tpu.memory_space<vmem>>, vector<1x128xf32>
    %214 = vector.shape_cast %213 : vector<1x128xf32> to vector<128xf32>
    %215 = vector.shape_cast %214 : vector<128xf32> to vector<1x1x128xf32>
    %216 = vector.broadcast %215 : vector<1x1x128xf32> to vector<1x16x128xf32>
    %217 = arith.mulf %212, %216 : vector<1x16x128xf32>
    %218 = arith.addf %211, %217 : vector<1x16x128xf32>
    %c126_i32_80 = arith.constant 126 : i32
    %219 = tpu.dynamic_rotate %205 by %c126_i32_80 dim 2 : vector<1x16x128xf32>, i32 -> vector<1x16x128xf32>
    %c23 = arith.constant 23 : index
    %c0_81 = arith.constant 0 : index
    %220 = vector.load %arg5[%c23, %c0_81] : memref<49x128xf32, #tpu.memory_space<vmem>>, vector<1x128xf32>
    %221 = vector.shape_cast %220 : vector<1x128xf32> to vector<128xf32>
    %222 = vector.shape_cast %221 : vector<128xf32> to vector<1x1x128xf32>
    %223 = vector.broadcast %222 : vector<1x1x128xf32> to vector<1x16x128xf32>
    %224 = arith.mulf %219, %223 : vector<1x16x128xf32>
    %225 = arith.addf %218, %224 : vector<1x16x128xf32>
    %c125_i32_82 = arith.constant 125 : i32
    %226 = tpu.dynamic_rotate %205 by %c125_i32_82 dim 2 : vector<1x16x128xf32>, i32 -> vector<1x16x128xf32>
    %c24 = arith.constant 24 : index
    %c0_83 = arith.constant 0 : index
    %227 = vector.load %arg5[%c24, %c0_83] : memref<49x128xf32, #tpu.memory_space<vmem>>, vector<1x128xf32>
    %228 = vector.shape_cast %227 : vector<1x128xf32> to vector<128xf32>
    %229 = vector.shape_cast %228 : vector<128xf32> to vector<1x1x128xf32>
    %230 = vector.broadcast %229 : vector<1x1x128xf32> to vector<1x16x128xf32>
    %231 = arith.mulf %226, %230 : vector<1x16x128xf32>
    %232 = arith.addf %225, %231 : vector<1x16x128xf32>
    %c124_i32_84 = arith.constant 124 : i32
    %233 = tpu.dynamic_rotate %205 by %c124_i32_84 dim 2 : vector<1x16x128xf32>, i32 -> vector<1x16x128xf32>
    %c25 = arith.constant 25 : index
    %c0_85 = arith.constant 0 : index
    %234 = vector.load %arg5[%c25, %c0_85] : memref<49x128xf32, #tpu.memory_space<vmem>>, vector<1x128xf32>
    %235 = vector.shape_cast %234 : vector<1x128xf32> to vector<128xf32>
    %236 = vector.shape_cast %235 : vector<128xf32> to vector<1x1x128xf32>
    %237 = vector.broadcast %236 : vector<1x1x128xf32> to vector<1x16x128xf32>
    %238 = arith.mulf %233, %237 : vector<1x16x128xf32>
    %239 = arith.addf %232, %238 : vector<1x16x128xf32>
    %c123_i32_86 = arith.constant 123 : i32
    %240 = tpu.dynamic_rotate %205 by %c123_i32_86 dim 2 : vector<1x16x128xf32>, i32 -> vector<1x16x128xf32>
    %c26 = arith.constant 26 : index
    %c0_87 = arith.constant 0 : index
    %241 = vector.load %arg5[%c26, %c0_87] : memref<49x128xf32, #tpu.memory_space<vmem>>, vector<1x128xf32>
    %242 = vector.shape_cast %241 : vector<1x128xf32> to vector<128xf32>
    %243 = vector.shape_cast %242 : vector<128xf32> to vector<1x1x128xf32>
    %244 = vector.broadcast %243 : vector<1x1x128xf32> to vector<1x16x128xf32>
    %245 = arith.mulf %240, %244 : vector<1x16x128xf32>
    %246 = arith.addf %239, %245 : vector<1x16x128xf32>
    %c122_i32_88 = arith.constant 122 : i32
    %247 = tpu.dynamic_rotate %205 by %c122_i32_88 dim 2 : vector<1x16x128xf32>, i32 -> vector<1x16x128xf32>
    %c27 = arith.constant 27 : index
    %c0_89 = arith.constant 0 : index
    %248 = vector.load %arg5[%c27, %c0_89] : memref<49x128xf32, #tpu.memory_space<vmem>>, vector<1x128xf32>
    %249 = vector.shape_cast %248 : vector<1x128xf32> to vector<128xf32>
    %250 = vector.shape_cast %249 : vector<128xf32> to vector<1x1x128xf32>
    %251 = vector.broadcast %250 : vector<1x1x128xf32> to vector<1x16x128xf32>
    %252 = arith.mulf %247, %251 : vector<1x16x128xf32>
    %253 = arith.addf %246, %252 : vector<1x16x128xf32>
    %c0_90 = arith.constant 0 : index
    %c9_91 = arith.constant 9 : index
    %c0_92 = arith.constant 0 : index
    %254 = vector.load %arg10[%c0_90, %c9_91, %c0_92] : memref<1x32x128xf32, #tpu.memory_space<vmem>>, vector<1x16x128xf32>
    %c28 = arith.constant 28 : index
    %c0_93 = arith.constant 0 : index
    %255 = vector.load %arg5[%c28, %c0_93] : memref<49x128xf32, #tpu.memory_space<vmem>>, vector<1x128xf32>
    %256 = vector.shape_cast %255 : vector<1x128xf32> to vector<128xf32>
    %257 = vector.shape_cast %256 : vector<128xf32> to vector<1x1x128xf32>
    %258 = vector.broadcast %257 : vector<1x1x128xf32> to vector<1x16x128xf32>
    %259 = arith.mulf %254, %258 : vector<1x16x128xf32>
    %260 = arith.addf %253, %259 : vector<1x16x128xf32>
    %c127_i32_94 = arith.constant 127 : i32
    %261 = tpu.dynamic_rotate %254 by %c127_i32_94 dim 2 : vector<1x16x128xf32>, i32 -> vector<1x16x128xf32>
    %c29 = arith.constant 29 : index
    %c0_95 = arith.constant 0 : index
    %262 = vector.load %arg5[%c29, %c0_95] : memref<49x128xf32, #tpu.memory_space<vmem>>, vector<1x128xf32>
    %263 = vector.shape_cast %262 : vector<1x128xf32> to vector<128xf32>
    %264 = vector.shape_cast %263 : vector<128xf32> to vector<1x1x128xf32>
    %265 = vector.broadcast %264 : vector<1x1x128xf32> to vector<1x16x128xf32>
    %266 = arith.mulf %261, %265 : vector<1x16x128xf32>
    %267 = arith.addf %260, %266 : vector<1x16x128xf32>
    %c126_i32_96 = arith.constant 126 : i32
    %268 = tpu.dynamic_rotate %254 by %c126_i32_96 dim 2 : vector<1x16x128xf32>, i32 -> vector<1x16x128xf32>
    %c30 = arith.constant 30 : index
    %c0_97 = arith.constant 0 : index
    %269 = vector.load %arg5[%c30, %c0_97] : memref<49x128xf32, #tpu.memory_space<vmem>>, vector<1x128xf32>
    %270 = vector.shape_cast %269 : vector<1x128xf32> to vector<128xf32>
    %271 = vector.shape_cast %270 : vector<128xf32> to vector<1x1x128xf32>
    %272 = vector.broadcast %271 : vector<1x1x128xf32> to vector<1x16x128xf32>
    %273 = arith.mulf %268, %272 : vector<1x16x128xf32>
    %274 = arith.addf %267, %273 : vector<1x16x128xf32>
    %c125_i32_98 = arith.constant 125 : i32
    %275 = tpu.dynamic_rotate %254 by %c125_i32_98 dim 2 : vector<1x16x128xf32>, i32 -> vector<1x16x128xf32>
    %c31 = arith.constant 31 : index
    %c0_99 = arith.constant 0 : index
    %276 = vector.load %arg5[%c31, %c0_99] : memref<49x128xf32, #tpu.memory_space<vmem>>, vector<1x128xf32>
    %277 = vector.shape_cast %276 : vector<1x128xf32> to vector<128xf32>
    %278 = vector.shape_cast %277 : vector<128xf32> to vector<1x1x128xf32>
    %279 = vector.broadcast %278 : vector<1x1x128xf32> to vector<1x16x128xf32>
    %280 = arith.mulf %275, %279 : vector<1x16x128xf32>
    %281 = arith.addf %274, %280 : vector<1x16x128xf32>
    %c124_i32_100 = arith.constant 124 : i32
    %282 = tpu.dynamic_rotate %254 by %c124_i32_100 dim 2 : vector<1x16x128xf32>, i32 -> vector<1x16x128xf32>
    %c32 = arith.constant 32 : index
    %c0_101 = arith.constant 0 : index
    %283 = vector.load %arg5[%c32, %c0_101] : memref<49x128xf32, #tpu.memory_space<vmem>>, vector<1x128xf32>
    %284 = vector.shape_cast %283 : vector<1x128xf32> to vector<128xf32>
    %285 = vector.shape_cast %284 : vector<128xf32> to vector<1x1x128xf32>
    %286 = vector.broadcast %285 : vector<1x1x128xf32> to vector<1x16x128xf32>
    %287 = arith.mulf %282, %286 : vector<1x16x128xf32>
    %288 = arith.addf %281, %287 : vector<1x16x128xf32>
    %c123_i32_102 = arith.constant 123 : i32
    %289 = tpu.dynamic_rotate %254 by %c123_i32_102 dim 2 : vector<1x16x128xf32>, i32 -> vector<1x16x128xf32>
    %c33 = arith.constant 33 : index
    %c0_103 = arith.constant 0 : index
    %290 = vector.load %arg5[%c33, %c0_103] : memref<49x128xf32, #tpu.memory_space<vmem>>, vector<1x128xf32>
    %291 = vector.shape_cast %290 : vector<1x128xf32> to vector<128xf32>
    %292 = vector.shape_cast %291 : vector<128xf32> to vector<1x1x128xf32>
    %293 = vector.broadcast %292 : vector<1x1x128xf32> to vector<1x16x128xf32>
    %294 = arith.mulf %289, %293 : vector<1x16x128xf32>
    %295 = arith.addf %288, %294 : vector<1x16x128xf32>
    %c122_i32_104 = arith.constant 122 : i32
    %296 = tpu.dynamic_rotate %254 by %c122_i32_104 dim 2 : vector<1x16x128xf32>, i32 -> vector<1x16x128xf32>
    %c34 = arith.constant 34 : index
    %c0_105 = arith.constant 0 : index
    %297 = vector.load %arg5[%c34, %c0_105] : memref<49x128xf32, #tpu.memory_space<vmem>>, vector<1x128xf32>
    %298 = vector.shape_cast %297 : vector<1x128xf32> to vector<128xf32>
    %299 = vector.shape_cast %298 : vector<128xf32> to vector<1x1x128xf32>
    %300 = vector.broadcast %299 : vector<1x1x128xf32> to vector<1x16x128xf32>
    %301 = arith.mulf %296, %300 : vector<1x16x128xf32>
    %302 = arith.addf %295, %301 : vector<1x16x128xf32>
    %c0_106 = arith.constant 0 : index
    %c10_107 = arith.constant 10 : index
    %c0_108 = arith.constant 0 : index
    %303 = vector.load %arg10[%c0_106, %c10_107, %c0_108] : memref<1x32x128xf32, #tpu.memory_space<vmem>>, vector<1x16x128xf32>
    %c35 = arith.constant 35 : index
    %c0_109 = arith.constant 0 : index
    %304 = vector.load %arg5[%c35, %c0_109] : memref<49x128xf32, #tpu.memory_space<vmem>>, vector<1x128xf32>
    %305 = vector.shape_cast %304 : vector<1x128xf32> to vector<128xf32>
    %306 = vector.shape_cast %305 : vector<128xf32> to vector<1x1x128xf32>
    %307 = vector.broadcast %306 : vector<1x1x128xf32> to vector<1x16x128xf32>
    %308 = arith.mulf %303, %307 : vector<1x16x128xf32>
    %309 = arith.addf %302, %308 : vector<1x16x128xf32>
    %c127_i32_110 = arith.constant 127 : i32
    %310 = tpu.dynamic_rotate %303 by %c127_i32_110 dim 2 : vector<1x16x128xf32>, i32 -> vector<1x16x128xf32>
    %c36 = arith.constant 36 : index
    %c0_111 = arith.constant 0 : index
    %311 = vector.load %arg5[%c36, %c0_111] : memref<49x128xf32, #tpu.memory_space<vmem>>, vector<1x128xf32>
    %312 = vector.shape_cast %311 : vector<1x128xf32> to vector<128xf32>
    %313 = vector.shape_cast %312 : vector<128xf32> to vector<1x1x128xf32>
    %314 = vector.broadcast %313 : vector<1x1x128xf32> to vector<1x16x128xf32>
    %315 = arith.mulf %310, %314 : vector<1x16x128xf32>
    %316 = arith.addf %309, %315 : vector<1x16x128xf32>
    %c126_i32_112 = arith.constant 126 : i32
    %317 = tpu.dynamic_rotate %303 by %c126_i32_112 dim 2 : vector<1x16x128xf32>, i32 -> vector<1x16x128xf32>
    %c37 = arith.constant 37 : index
    %c0_113 = arith.constant 0 : index
    %318 = vector.load %arg5[%c37, %c0_113] : memref<49x128xf32, #tpu.memory_space<vmem>>, vector<1x128xf32>
    %319 = vector.shape_cast %318 : vector<1x128xf32> to vector<128xf32>
    %320 = vector.shape_cast %319 : vector<128xf32> to vector<1x1x128xf32>
    %321 = vector.broadcast %320 : vector<1x1x128xf32> to vector<1x16x128xf32>
    %322 = arith.mulf %317, %321 : vector<1x16x128xf32>
    %323 = arith.addf %316, %322 : vector<1x16x128xf32>
    %c125_i32_114 = arith.constant 125 : i32
    %324 = tpu.dynamic_rotate %303 by %c125_i32_114 dim 2 : vector<1x16x128xf32>, i32 -> vector<1x16x128xf32>
    %c38 = arith.constant 38 : index
    %c0_115 = arith.constant 0 : index
    %325 = vector.load %arg5[%c38, %c0_115] : memref<49x128xf32, #tpu.memory_space<vmem>>, vector<1x128xf32>
    %326 = vector.shape_cast %325 : vector<1x128xf32> to vector<128xf32>
    %327 = vector.shape_cast %326 : vector<128xf32> to vector<1x1x128xf32>
    %328 = vector.broadcast %327 : vector<1x1x128xf32> to vector<1x16x128xf32>
    %329 = arith.mulf %324, %328 : vector<1x16x128xf32>
    %330 = arith.addf %323, %329 : vector<1x16x128xf32>
    %c124_i32_116 = arith.constant 124 : i32
    %331 = tpu.dynamic_rotate %303 by %c124_i32_116 dim 2 : vector<1x16x128xf32>, i32 -> vector<1x16x128xf32>
    %c39 = arith.constant 39 : index
    %c0_117 = arith.constant 0 : index
    %332 = vector.load %arg5[%c39, %c0_117] : memref<49x128xf32, #tpu.memory_space<vmem>>, vector<1x128xf32>
    %333 = vector.shape_cast %332 : vector<1x128xf32> to vector<128xf32>
    %334 = vector.shape_cast %333 : vector<128xf32> to vector<1x1x128xf32>
    %335 = vector.broadcast %334 : vector<1x1x128xf32> to vector<1x16x128xf32>
    %336 = arith.mulf %331, %335 : vector<1x16x128xf32>
    %337 = arith.addf %330, %336 : vector<1x16x128xf32>
    %c123_i32_118 = arith.constant 123 : i32
    %338 = tpu.dynamic_rotate %303 by %c123_i32_118 dim 2 : vector<1x16x128xf32>, i32 -> vector<1x16x128xf32>
    %c40 = arith.constant 40 : index
    %c0_119 = arith.constant 0 : index
    %339 = vector.load %arg5[%c40, %c0_119] : memref<49x128xf32, #tpu.memory_space<vmem>>, vector<1x128xf32>
    %340 = vector.shape_cast %339 : vector<1x128xf32> to vector<128xf32>
    %341 = vector.shape_cast %340 : vector<128xf32> to vector<1x1x128xf32>
    %342 = vector.broadcast %341 : vector<1x1x128xf32> to vector<1x16x128xf32>
    %343 = arith.mulf %338, %342 : vector<1x16x128xf32>
    %344 = arith.addf %337, %343 : vector<1x16x128xf32>
    %c122_i32_120 = arith.constant 122 : i32
    %345 = tpu.dynamic_rotate %303 by %c122_i32_120 dim 2 : vector<1x16x128xf32>, i32 -> vector<1x16x128xf32>
    %c41 = arith.constant 41 : index
    %c0_121 = arith.constant 0 : index
    %346 = vector.load %arg5[%c41, %c0_121] : memref<49x128xf32, #tpu.memory_space<vmem>>, vector<1x128xf32>
    %347 = vector.shape_cast %346 : vector<1x128xf32> to vector<128xf32>
    %348 = vector.shape_cast %347 : vector<128xf32> to vector<1x1x128xf32>
    %349 = vector.broadcast %348 : vector<1x1x128xf32> to vector<1x16x128xf32>
    %350 = arith.mulf %345, %349 : vector<1x16x128xf32>
    %351 = arith.addf %344, %350 : vector<1x16x128xf32>
    %c0_122 = arith.constant 0 : index
    %c11_123 = arith.constant 11 : index
    %c0_124 = arith.constant 0 : index
    %352 = vector.load %arg10[%c0_122, %c11_123, %c0_124] : memref<1x32x128xf32, #tpu.memory_space<vmem>>, vector<1x16x128xf32>
    %c42 = arith.constant 42 : index
    %c0_125 = arith.constant 0 : index
    %353 = vector.load %arg5[%c42, %c0_125] : memref<49x128xf32, #tpu.memory_space<vmem>>, vector<1x128xf32>
    %354 = vector.shape_cast %353 : vector<1x128xf32> to vector<128xf32>
    %355 = vector.shape_cast %354 : vector<128xf32> to vector<1x1x128xf32>
    %356 = vector.broadcast %355 : vector<1x1x128xf32> to vector<1x16x128xf32>
    %357 = arith.mulf %352, %356 : vector<1x16x128xf32>
    %358 = arith.addf %351, %357 : vector<1x16x128xf32>
    %c127_i32_126 = arith.constant 127 : i32
    %359 = tpu.dynamic_rotate %352 by %c127_i32_126 dim 2 : vector<1x16x128xf32>, i32 -> vector<1x16x128xf32>
    %c43 = arith.constant 43 : index
    %c0_127 = arith.constant 0 : index
    %360 = vector.load %arg5[%c43, %c0_127] : memref<49x128xf32, #tpu.memory_space<vmem>>, vector<1x128xf32>
    %361 = vector.shape_cast %360 : vector<1x128xf32> to vector<128xf32>
    %362 = vector.shape_cast %361 : vector<128xf32> to vector<1x1x128xf32>
    %363 = vector.broadcast %362 : vector<1x1x128xf32> to vector<1x16x128xf32>
    %364 = arith.mulf %359, %363 : vector<1x16x128xf32>
    %365 = arith.addf %358, %364 : vector<1x16x128xf32>
    %c126_i32_128 = arith.constant 126 : i32
    %366 = tpu.dynamic_rotate %352 by %c126_i32_128 dim 2 : vector<1x16x128xf32>, i32 -> vector<1x16x128xf32>
    %c44 = arith.constant 44 : index
    %c0_129 = arith.constant 0 : index
    %367 = vector.load %arg5[%c44, %c0_129] : memref<49x128xf32, #tpu.memory_space<vmem>>, vector<1x128xf32>
    %368 = vector.shape_cast %367 : vector<1x128xf32> to vector<128xf32>
    %369 = vector.shape_cast %368 : vector<128xf32> to vector<1x1x128xf32>
    %370 = vector.broadcast %369 : vector<1x1x128xf32> to vector<1x16x128xf32>
    %371 = arith.mulf %366, %370 : vector<1x16x128xf32>
    %372 = arith.addf %365, %371 : vector<1x16x128xf32>
    %c125_i32_130 = arith.constant 125 : i32
    %373 = tpu.dynamic_rotate %352 by %c125_i32_130 dim 2 : vector<1x16x128xf32>, i32 -> vector<1x16x128xf32>
    %c45 = arith.constant 45 : index
    %c0_131 = arith.constant 0 : index
    %374 = vector.load %arg5[%c45, %c0_131] : memref<49x128xf32, #tpu.memory_space<vmem>>, vector<1x128xf32>
    %375 = vector.shape_cast %374 : vector<1x128xf32> to vector<128xf32>
    %376 = vector.shape_cast %375 : vector<128xf32> to vector<1x1x128xf32>
    %377 = vector.broadcast %376 : vector<1x1x128xf32> to vector<1x16x128xf32>
    %378 = arith.mulf %373, %377 : vector<1x16x128xf32>
    %379 = arith.addf %372, %378 : vector<1x16x128xf32>
    %c124_i32_132 = arith.constant 124 : i32
    %380 = tpu.dynamic_rotate %352 by %c124_i32_132 dim 2 : vector<1x16x128xf32>, i32 -> vector<1x16x128xf32>
    %c46 = arith.constant 46 : index
    %c0_133 = arith.constant 0 : index
    %381 = vector.load %arg5[%c46, %c0_133] : memref<49x128xf32, #tpu.memory_space<vmem>>, vector<1x128xf32>
    %382 = vector.shape_cast %381 : vector<1x128xf32> to vector<128xf32>
    %383 = vector.shape_cast %382 : vector<128xf32> to vector<1x1x128xf32>
    %384 = vector.broadcast %383 : vector<1x1x128xf32> to vector<1x16x128xf32>
    %385 = arith.mulf %380, %384 : vector<1x16x128xf32>
    %386 = arith.addf %379, %385 : vector<1x16x128xf32>
    %c123_i32_134 = arith.constant 123 : i32
    %387 = tpu.dynamic_rotate %352 by %c123_i32_134 dim 2 : vector<1x16x128xf32>, i32 -> vector<1x16x128xf32>
    %c47 = arith.constant 47 : index
    %c0_135 = arith.constant 0 : index
    %388 = vector.load %arg5[%c47, %c0_135] : memref<49x128xf32, #tpu.memory_space<vmem>>, vector<1x128xf32>
    %389 = vector.shape_cast %388 : vector<1x128xf32> to vector<128xf32>
    %390 = vector.shape_cast %389 : vector<128xf32> to vector<1x1x128xf32>
    %391 = vector.broadcast %390 : vector<1x1x128xf32> to vector<1x16x128xf32>
    %392 = arith.mulf %387, %391 : vector<1x16x128xf32>
    %393 = arith.addf %386, %392 : vector<1x16x128xf32>
    %c122_i32_136 = arith.constant 122 : i32
    %394 = tpu.dynamic_rotate %352 by %c122_i32_136 dim 2 : vector<1x16x128xf32>, i32 -> vector<1x16x128xf32>
    %c48 = arith.constant 48 : index
    %c0_137 = arith.constant 0 : index
    %395 = vector.load %arg5[%c48, %c0_137] : memref<49x128xf32, #tpu.memory_space<vmem>>, vector<1x128xf32>
    %396 = vector.shape_cast %395 : vector<1x128xf32> to vector<128xf32>
    %397 = vector.shape_cast %396 : vector<128xf32> to vector<1x1x128xf32>
    %398 = vector.broadcast %397 : vector<1x1x128xf32> to vector<1x16x128xf32>
    %399 = arith.mulf %394, %398 : vector<1x16x128xf32>
    %400 = arith.addf %393, %399 : vector<1x16x128xf32>
    %401 = vector.shape_cast %400 : vector<1x16x128xf32> to vector<16x128xf32>
    %c0_138 = arith.constant 0 : index
    %c0_139 = arith.constant 0 : index
    %402 = vector.load %arg8[%c0_138, %c0_139] : memref<128x256xf32, #tpu.memory_space<vmem>>, vector<128x256xf32>
    %cst_140 = arith.constant dense<0.000000e+00> : vector<16x256xf32>
    %403 = tpu.matmul %401, %402, %cst_140 {dimension_numbers = #tpu.dot_dimension_numbers<[1], [0], [0], [1], [0, 0, 1, 1], [], []>} : vector<16x128xf32>, vector<128x256xf32>, vector<16x256xf32> -> vector<16x256xf32>
    %404 = arith.negf %403 : vector<16x256xf32>
    %405 = math.exp %404 : vector<16x256xf32>
    %cst_141 = arith.constant 1.000000e+00 : f32
    %406 = vector.broadcast %cst_141 : f32 to vector<16x256xf32>
    %407 = arith.addf %406, %405 : vector<16x256xf32>
    %408 = arith.divf %406, %407 : vector<16x256xf32>
    %409 = vector.shape_cast %408 : vector<16x256xf32> to vector<1x16x256xf32>
    %410 = arith.mulf %37, %409 : vector<1x16x256xf32>
    %c0_142 = arith.constant 0 : index
    %c0_143 = arith.constant 0 : index
    %c0_144 = arith.constant 0 : index
    %411 = vector.load %arg9[%c0_142, %c0_143, %c0_144] : memref<1x16x256xf32, #tpu.memory_space<vmem>>, vector<1x16x256xf32>
    tpu.vector_store %arg9[%c0_142, %c0_143, %c0_144], %410 {strides = array<i32>} : memref<1x16x256xf32, #tpu.memory_space<vmem>>, vector<1x16x256xf32>,
    return
  }
  func.func @transform_0(%arg0: i32) -> (i32, i32, i32) {
    %c0_i32 = arith.constant 0 : i32
    %c0_i32_0 = arith.constant 0 : i32
    %c0_i32_1 = arith.constant 0 : i32
    return %arg0, %c0_i32, %c0_i32_0 : i32, i32, i32
  }
  func.func @transform_1(%arg0: i32) -> (i32, i32) {
    %c0_i32 = arith.constant 0 : i32
    %c0_i32_0 = arith.constant 0 : i32
    %c0_i32_1 = arith.constant 0 : i32
    return %c0_i32, %c0_i32_0 : i32, i32
  }
  func.func @transform_2(%arg0: i32) -> (i32, i32) {
    %c0_i32 = arith.constant 0 : i32
    %c0_i32_0 = arith.constant 0 : i32
    %c0_i32_1 = arith.constant 0 : i32
    return %c0_i32, %c0_i32_0 : i32, i32
  }
  func.func @transform_3(%arg0: i32) -> (i32, i32) {
    %c0_i32 = arith.constant 0 : i32
    %c0_i32_0 = arith.constant 0 : i32
    %c0_i32_1 = arith.constant 0 : i32
    return %c0_i32, %c0_i32_0 : i32, i32
  }
  func.func @transform_4(%arg0: i32) -> (i32, i32) {
    %c0_i32 = arith.constant 0 : i32
    %c0_i32_0 = arith.constant 0 : i32
    %c0_i32_1 = arith.constant 0 : i32
    return %c0_i32, %c0_i32_0 : i32, i32
  }
  func.func @transform_5(%arg0: i32) -> (i32, i32) {
    %c0_i32 = arith.constant 0 : i32
    %c0_i32_0 = arith.constant 0 : i32
    %c0_i32_1 = arith.constant 0 : i32
    return %c0_i32, %c0_i32_0 : i32, i32
  }
  func.func @transform_6(%arg0: i32) -> (i32, i32) {
    %c0_i32 = arith.constant 0 : i32
    %c0_i32_0 = arith.constant 0 : i32
    %c0_i32_1 = arith.constant 0 : i32
    return %c0_i32, %c0_i32_0 : i32, i32
  }
  func.func @transform_7(%arg0: i32) -> (i32, i32) {
    %c0_i32 = arith.constant 0 : i32
    %c0_i32_0 = arith.constant 0 : i32
    %c0_i32_1 = arith.constant 0 : i32
    return %c0_i32, %c0_i32_0 : i32, i32
  }
  func.func @transform_8(%arg0: i32) -> (i32, i32, i32) {
    %c0_i32 = arith.constant 0 : i32
    %c0_i32_0 = arith.constant 0 : i32
    %c0_i32_1 = arith.constant 0 : i32
    return %arg0, %c0_i32, %c0_i32_0 : i32, i32, i32
  }
}

</mosaic_0001>

<llo_original>
// kernel: tpu_custom_call.1
$region0: #{tpu_custom_call.1}
  #allocation0 [shape = 'u32[]', space=smem, size = 0x4, offset = 0x4, fixed_abs, tag = 'smem constant byte address 0x4 - core index']
  #allocation1 [shape = 'u32[144,128]{1,0:T(1,128)}', space=vmem, size = 0x12000, scoped, tag = 'internal scratch']
  #allocation2 [shape = 'f32[1,32,128]{2,1,0:T(8,128)}', space=vmem, size = 0x4000, scoped, tag = 'scratch operand']
  %s0 = inlined_call_operand.hbm [shape: f32[2,16,256], index: 0, kind: input, shape index: {}]
  %s1 = inlined_call_operand.vmem [shape: f32[16,4], index: 1, kind: input, shape index: {}]
  %s2 = inlined_call_operand.vmem [shape: f32[4,16], index: 2, kind: input, shape index: {}]
  %s3 = inlined_call_operand.hbm [shape: f32[16,256], index: 3, kind: input, shape index: {}]
  %s4 = inlined_call_operand.hbm [shape: f32[49,128], index: 4, kind: input, shape index: {}]
  %s5 = inlined_call_operand.hbm [shape: f32[256,128], index: 5, kind: input, shape index: {}]
  %s6 = inlined_call_operand.hbm [shape: f32[256,128], index: 6, kind: input, shape index: {}]
  %s7 = inlined_call_operand.hbm [shape: f32[128,256], index: 7, kind: input, shape index: {}]
  %s8 = inlined_call_operand.hbm [shape: f32[2,16,256], index: 8, kind: output, shape index: {}]
  %s9 = sld [smem:[#allocation0]]
  $region89: #{tpu_custom_call.1} parent=0
    _
  %s11 = ssub.s32 1, %s9
  %s12 = scalar_select 0, %s11, %s9
  $region1: #{tpu_custom_call.1} parent=0
    #allocation3 [shape = 'u8[32768]{0}', space=vmem, size = 0x8000, scoped, tag = 'input window, operand 0']
    #allocation4 [shape = 's32[2]{0}', space=sflag, size = 0x8, scoped, tag = 'scoped memory for tpu_custom_call.1']
    #allocation5 [shape = 's32[2]{0}', space=sflag, size = 0x8, scoped, tag = 'scoped memory for tpu_custom_call.1']
    #allocation6 [shape = 'u8[16384]{0}', space=vmem, size = 0x4000, scoped, tag = 'input window, operand 3, single buffered']
    #allocation7 [shape = 's32[1]{0}', space=sflag, size = 0x4, scoped, tag = 'scoped memory for tpu_custom_call.1']
    #allocation8 [shape = 'u8[28672]{0}', space=vmem, size = 0x7000, scoped, tag = 'input window, operand 4, single buffered']
    #allocation9 [shape = 'u8[131072]{0}', space=vmem, size = 0x20000, scoped, tag = 'input window, operand 5, single buffered']
    #allocation10 [shape = 's32[1]{0}', space=sflag, size = 0x4, scoped, tag = 'scoped memory for tpu_custom_call.1']
    #allocation11 [shape = 'u8[131072]{0}', space=vmem, size = 0x20000, scoped, tag = 'input window, operand 6, single buffered']
    #allocation12 [shape = 'u8[131072]{0}', space=vmem, size = 0x20000, scoped, tag = 'input window, operand 7, single buffered']
    #allocation13 [shape = 's32[1]{0}', space=sflag, size = 0x4, scoped, tag = 'scoped memory for tpu_custom_call.1']
    #allocation14 [shape = 'u8[32768]{0}', space=vmem, size = 0x8000, scoped, tag = 'output window, operand 0']
    %13 = vsyncpa [#allocation4], 0
    %s14 = scalar_lea.sflag [#allocation4], 1
    %15 = vsyncpa %s14, 0
    %16 = vsyncpa [#allocation7], 0
    %17 = vsyncpa [#allocation10], 0
    %18 = vsyncpa [#allocation13], 0
    %19 = vsyncpa [#allocation5], 0
    %s20 = scalar_lea.sflag [#allocation5], 1
    %21 = vsyncpa %s20, 0
    loop: start=0, step=1, limit=4
    $region2: #{tpu_custom_call.1} parent=1 // loop_pre_header
      _
    $region3: #{tpu_custom_call.1} parent=1 // loop_header
      %s23 = sphi 0, %s27
      %p24 = scmp.ge.s32.totalorder %s23, 4
      %s33 = sphi 0, %s35
      %s36 = sphi 0, %s33
      %s37 = sphi 0, %s36
      %s53 = sphi 0, %s37
      %s57 = sphi 0, %s57
      %s59 = sphi 0, %s57
      %s60 = sphi 0, %s59
      %s74 = sphi 0, %s60
      %s78 = sphi 0, %s78
      %s80 = sphi 0, %s78
      %s81 = sphi 0, %s80
      %s95 = sphi 0, %s81
      %s99 = sphi 0, %s99
      %s101 = sphi 0, %s99
      %s102 = sphi 0, %s101
      %s116 = sphi 0, %s102
      %s120 = sphi 0, %s120
      %s122 = sphi 0, %s120
      %s123 = sphi 0, %s122
      %s137 = sphi 0, %s123
      %s141 = sphi 0, %s141
      %s143 = sphi 0, %s141
      %s144 = sphi 0, %s143
      %s158 = sphi 0, %s144
      %s162 = sphi 0, %s162
      %s164 = sphi 0, %s162
      %s165 = sphi 0, %s164
      %s179 = sphi 0, %s165
      %s183 = sphi 0, %s183
      %s185 = sphi 0, %s183
      %s186 = sphi 0, %s185
      %s200 = sphi 0, %s186
      %s206 = sphi 0, %s208
      %s209 = sphi 0, %s206
      %s210 = sphi 0, %s209
      %s226 = sphi 0, %s210
    $region4: #{tpu_custom_call.1} parent=1 // loop_header_branch
      %26 = sbr.rel (%p24) target = $region8
    $region5: #{tpu_custom_call.1} parent=1 // loop_body
      %s28 = ssub.s32 %s23, 1
      %s29 = ssub.s32 %s23, 2
      %s30 = sadd.s32 %s23, 1
      %s31 = ssub.s32 %s23, %s30
      %p32 = scmp.eq.s32.totalorder %s31, 0
      %s34 = sadd.s32 %s33, 1
      %s35 = scalar_select %p32, %s33, %s34
      %p38 = pneg %p32
      %p39 = scmp.eq.s32.totalorder %s23, 1
      %p40 = por %p38, %p39
      %p41 = scmp.ne.s32.totalorder %s33, %s36
      %p42 = scmp.eq.s32.totalorder %s23, 0
      %p43 = por %p41, %p42
      %p44 = scmp.ne.s32.totalorder %s33, %s36
      %p45 = scmp.eq.s32.totalorder %s28, 1
      %p46 = por %p44, %p45
      %p47 = scmp.ne.s32.totalorder %s36, %s37
      %p48 = scmp.eq.s32.totalorder %s28, 0
      %p49 = por %p47, %p48
      %p50 = scmp.ne.s32.totalorder %s36, %s37
      %p51 = scmp.eq.s32.totalorder %s29, 1
      %p52 = por %p50, %p51
      %p54 = scmp.ne.s32.totalorder %s37, %s53
      %p55 = scmp.eq.s32.totalorder %s29, 0
      %p56 = por %p54, %p55
      %s58 = sadd.s32 %s57, 1
      %p61 = scmp.eq.s32.totalorder %s23, 1
      %p62 = scmp.ne.s32.totalorder %s57, %s59
      %p63 = scmp.eq.s32.totalorder %s23, 0
      %p64 = por %p62, %p63
      %p65 = scmp.ne.s32.totalorder %s57, %s59
      %p66 = scmp.eq.s32.totalorder %s28, 1
      %p67 = por %p65, %p66
      %p68 = scmp.ne.s32.totalorder %s59, %s60
      %p69 = scmp.eq.s32.totalorder %s28, 0
      %p70 = por %p68, %p69
      %p71 = scmp.ne.s32.totalorder %s59, %s60
      %p72 = scmp.eq.s32.totalorder %s29, 1
      %p73 = por %p71, %p72
      %p75 = scmp.ne.s32.totalorder %s60, %s74
      %p76 = scmp.eq.s32.totalorder %s29, 0
      %p77 = por %p75, %p76
      %s79 = sadd.s32 %s78, 1
      %p82 = scmp.eq.s32.totalorder %s23, 1
      %p83 = scmp.ne.s32.totalorder %s78, %s80
      %p84 = scmp.eq.s32.totalorder %s23, 0
      %p85 = por %p83, %p84
      %p86 = scmp.ne.s32.totalorder %s78, %s80
      %p87 = scmp.eq.s32.totalorder %s28, 1
      %p88 = por %p86, %p87
      %p89 = scmp.ne.s32.totalorder %s80, %s81
      %p90 = scmp.eq.s32.totalorder %s28, 0
      %p91 = por %p89, %p90
      %p92 = scmp.ne.s32.totalorder %s80, %s81
      %p93 = scmp.eq.s32.totalorder %s29, 1
      %p94 = por %p92, %p93
      %p96 = scmp.ne.s32.totalorder %s81, %s95
      %p97 = scmp.eq.s32.totalorder %s29, 0
      %p98 = por %p96, %p97
      %s100 = sadd.s32 %s99, 1
      %p103 = scmp.eq.s32.totalorder %s23, 1
      %p104 = scmp.ne.s32.totalorder %s99, %s101
      %p105 = scmp.eq.s32.totalorder %s23, 0
      %p106 = por %p104, %p105
      %p107 = scmp.ne.s32.totalorder %s99, %s101
      %p108 = scmp.eq.s32.totalorder %s28, 1
      %p109 = por %p107, %p108
      %p110 = scmp.ne.s32.totalorder %s101, %s102
      %p111 = scmp.eq.s32.totalorder %s28, 0
      %p112 = por %p110, %p111
      %p113 = scmp.ne.s32.totalorder %s101, %s102
      %p114 = scmp.eq.s32.totalorder %s29, 1
      %p115 = por %p113, %p114
      %p117 = scmp.ne.s32.totalorder %s102, %s116
      %p118 = scmp.eq.s32.totalorder %s29, 0
      %p119 = por %p117, %p118
      %s121 = sadd.s32 %s120, 1
      %p124 = scmp.eq.s32.totalorder %s23, 1
      %p125 = scmp.ne.s32.totalorder %s120, %s122
      %p126 = scmp.eq.s32.totalorder %s23, 0
      %p127 = por %p125, %p126
      %p128 = scmp.ne.s32.totalorder %s120, %s122
      %p129 = scmp.eq.s32.totalorder %s28, 1
      %p130 = por %p128, %p129
      %p131 = scmp.ne.s32.totalorder %s122, %s123
      %p132 = scmp.eq.s32.totalorder %s28, 0
      %p133 = por %p131, %p132
      %p134 = scmp.ne.s32.totalorder %s122, %s123
      %p135 = scmp.eq.s32.totalorder %s29, 1
      %p136 = por %p134, %p135
      %p138 = scmp.ne.s32.totalorder %s123, %s137
      %p139 = scmp.eq.s32.totalorder %s29, 0
      %p140 = por %p138, %p139
      %s142 = sadd.s32 %s141, 1
      %p145 = scmp.eq.s32.totalorder %s23, 1
      %p146 = scmp.ne.s32.totalorder %s141, %s143
      %p147 = scmp.eq.s32.totalorder %s23, 0
      %p148 = por %p146, %p147
      %p149 = scmp.ne.s32.totalorder %s141, %s143
      %p150 = scmp.eq.s32.totalorder %s28, 1
      %p151 = por %p149, %p150
      %p152 = scmp.ne.s32.totalorder %s143, %s144
      %p153 = scmp.eq.s32.totalorder %s28, 0
      %p154 = por %p152, %p153
      %p155 = scmp.ne.s32.totalorder %s143, %s144
      %p156 = scmp.eq.s32.totalorder %s29, 1
      %p157 = por %p155, %p156
      %p159 = scmp.ne.s32.totalorder %s144, %s158
      %p160 = scmp.eq.s32.totalorder %s29, 0
      %p161 = por %p159, %p160
      %s163 = sadd.s32 %s162, 1
      %p166 = scmp.eq.s32.totalorder %s23, 1
      %p167 = scmp.ne.s32.totalorder %s162, %s164
      %p168 = scmp.eq.s32.totalorder %s23, 0
      %p169 = por %p167, %p168
      %p170 = scmp.ne.s32.totalorder %s162, %s164
      %p171 = scmp.eq.s32.totalorder %s28, 1
      %p172 = por %p170, %p171
      %p173 = scmp.ne.s32.totalorder %s164, %s165
      %p174 = scmp.eq.s32.totalorder %s28, 0
      %p175 = por %p173, %p174
      %p176 = scmp.ne.s32.totalorder %s164, %s165
      %p177 = scmp.eq.s32.totalorder %s29, 1
      %p178 = por %p176, %p177
      %p180 = scmp.ne.s32.totalorder %s165, %s179
      %p181 = scmp.eq.s32.totalorder %s29, 0
      %p182 = por %p180, %p181
      %s184 = sadd.s32 %s183, 1
      %p187 = scmp.eq.s32.totalorder %s23, 1
      %p188 = scmp.ne.s32.totalorder %s183, %s185
      %p189 = scmp.eq.s32.totalorder %s23, 0
      %p190 = por %p188, %p189
      %p191 = scmp.ne.s32.totalorder %s183, %s185
      %p192 = scmp.eq.s32.totalorder %s28, 1
      %p193 = por %p191, %p192
      %p194 = scmp.ne.s32.totalorder %s185, %s186
      %p195 = scmp.eq.s32.totalorder %s28, 0
      %p196 = por %p194, %p195
      %p197 = scmp.ne.s32.totalorder %s185, %s186
      %p198 = scmp.eq.s32.totalorder %s29, 1
      %p199 = por %p197, %p198
      %p201 = scmp.ne.s32.totalorder %s186, %s200
      %p202 = scmp.eq.s32.totalorder %s29, 0
      %p203 = por %p201, %p202
      %s204 = ssub.s32 %s23, %s30
      %p205 = scmp.eq.s32.totalorder %s204, 0
      %s207 = sadd.s32 %s206, 1
      %s208 = scalar_select %p205, %s206, %s207
      %p211 = pneg %p205
      %p212 = scmp.eq.s32.totalorder %s23, 1
      %p213 = por %p211, %p212
      %p214 = scmp.ne.s32.totalorder %s206, %s209
      %p215 = scmp.eq.s32.totalorder %s23, 0
      %p216 = por %p214, %p215
      %p217 = scmp.ne.s32.totalorder %s206, %s209
      %p218 = scmp.eq.s32.totalorder %s28, 1
      %p219 = por %p217, %p218
      %p220 = scmp.ne.s32.totalorder %s209, %s210
      %p221 = scmp.eq.s32.totalorder %s28, 0
      %p222 = por %p220, %p221
      %p223 = scmp.ne.s32.totalorder %s209, %s210
      %p224 = scmp.eq.s32.totalorder %s29, 1
      %p225 = por %p223, %p224
      %p227 = scmp.ne.s32.totalorder %s210, %s226
      %p228 = scmp.eq.s32.totalorder %s29, 0
      %p229 = por %p227, %p228
      %p230 = scmp.le.s32.totalorder 1, %s23
      %p231 = scmp.lt.s32.totalorder %s23, 3
      %p232 = pnand %p230, %p231
      %p233 = pneg %p232
      // Predicated region
      $region9: #{tpu_custom_call.1} parent=5 // pred_check
        _
      $region10: #{tpu_custom_call.1} parent=5 // pred_check_branch
        %235 = sbr.rel (%p232) target = $region12
      $region11: #{tpu_custom_call.1} parent=5 // pred_region
        %s236 = ssub.s32 %s23, 1
        // Predicated region
        $region13: #{tpu_custom_call.1} parent=11 // pred_check
          %p237 = pneg %p70
        $region14: #{tpu_custom_call.1} parent=11 // pred_check_branch
          %239 = sbr.rel (%p237) target = $region16
        $region15: #{tpu_custom_call.1} parent=11 // pred_region
          _
        $region16: #{tpu_custom_call.1} parent=11 // pred_fallthru
          _
        // Predicated region
        $region17: #{tpu_custom_call.1} parent=11 // pred_check
          %p240 = pneg %p91
        $region18: #{tpu_custom_call.1} parent=11 // pred_check_branch
          %242 = sbr.rel (%p240) target = $region20
        $region19: #{tpu_custom_call.1} parent=11 // pred_region
          _
        $region20: #{tpu_custom_call.1} parent=11 // pred_fallthru
          _
        // Predicated region
        $region21: #{tpu_custom_call.1} parent=11 // pred_check
          %p243 = pneg %p112
        $region22: #{tpu_custom_call.1} parent=11 // pred_check_branch
          %245 = sbr.rel (%p243) target = $region24
        $region23: #{tpu_custom_call.1} parent=11 // pred_region
          %s247 = ssub.s32 512, 512
          %248 = vsyncadd [#allocation7], %s247
          %s249 = sshll.u32 [#allocation6], 4
          %s250 = int_to_ptr.vmem [resolvable:$true] %s249
          %255 = dma.hbm_to_vmem [thread:$0]  %s3, 512, %s250, [#allocation7], 256, 256, 16
        $region24: #{tpu_custom_call.1} parent=11 // pred_fallthru
          _
        // Predicated region
        $region25: #{tpu_custom_call.1} parent=11 // pred_check
          %p256 = pneg %p133
        $region26: #{tpu_custom_call.1} parent=11 // pred_check_branch
          %258 = sbr.rel (%p256) target = $region28
        $region27: #{tpu_custom_call.1} parent=11 // pred_region
          %s260 = ssub.s32 896, 896
          %261 = vsyncadd [#allocation7], %s260
          %s262 = sshll.u32 [#allocation8], 4
          %s263 = int_to_ptr.vmem [resolvable:$true] %s262
          %268 = dma.hbm_to_vmem [thread:$0]  %s4, 896, %s263, [#allocation7], 128, 128, 8
        $region28: #{tpu_custom_call.1} parent=11 // pred_fallthru
          _
        // Predicated region
        $region29: #{tpu_custom_call.1} parent=11 // pred_check
          %p269 = pneg %p154
        $region30: #{tpu_custom_call.1} parent=11 // pred_check_branch
          %271 = sbr.rel (%p269) target = $region32
        $region31: #{tpu_custom_call.1} parent=11 // pred_region
          %s273 = ssub.s32 4096, 4096
          %274 = vsyncadd [#allocation10], %s273
          %s275 = sshll.u32 [#allocation9], 4
          %s276 = int_to_ptr.vmem [resolvable:$true] %s275
          %281 = dma.hbm_to_vmem [thread:$0]  %s5, 4096, %s276, [#allocation10], 128, 128, 8
        $region32: #{tpu_custom_call.1} parent=11 // pred_fallthru
          _
        // Predicated region
        $region33: #{tpu_custom_call.1} parent=11 // pred_check
          %p282 = pneg %p175
        $region34: #{tpu_custom_call.1} parent=11 // pred_check_branch
          %284 = sbr.rel (%p282) target = $region36
        $region35: #{tpu_custom_call.1} parent=11 // pred_region
          %s286 = ssub.s32 4096, 4096
          %287 = vsyncadd [#allocation10], %s286
          %s288 = sshll.u32 [#allocation11], 4
          %s289 = int_to_ptr.vmem [resolvable:$true] %s288
          %294 = dma.hbm_to_vmem [thread:$0]  %s6, 4096, %s289, [#allocation10], 128, 128, 8
        $region36: #{tpu_custom_call.1} parent=11 // pred_fallthru
          _
        // Predicated region
        $region37: #{tpu_custom_call.1} parent=11 // pred_check
          %p295 = pneg %p196
        $region38: #{tpu_custom_call.1} parent=11 // pred_check_branch
          %297 = sbr.rel (%p295) target = $region40
        $region39: #{tpu_custom_call.1} parent=11 // pred_region
          %s299 = ssub.s32 4096, 4096
          %300 = vsyncadd [#allocation13], %s299
          %s301 = sshll.u32 [#allocation12], 4
          %s302 = int_to_ptr.vmem [resolvable:$true] %s301
          %307 = dma.hbm_to_vmem [thread:$0]  %s7, 4096, %s302, [#allocation13], 256, 256, 16
        $region40: #{tpu_custom_call.1} parent=11 // pred_fallthru
          _
      $region12: #{tpu_custom_call.1} parent=5 // pred_fallthru
        _
      %p308 = scmp.lt.s32.totalorder %s23, 2
      // Predicated region
      $region41: #{tpu_custom_call.1} parent=5 // pred_check
        %p309 = pneg %p308
      $region42: #{tpu_custom_call.1} parent=5 // pred_check_branch
        %311 = sbr.rel (%p309) target = $region44
      $region43: #{tpu_custom_call.1} parent=5 // pred_region
        // Predicated region
        $region45: #{tpu_custom_call.1} parent=43 // pred_check
          %p312 = pneg %p43
        $region46: #{tpu_custom_call.1} parent=43 // pred_check_branch
          %314 = sbr.rel (%p312) target = $region48
        $region47: #{tpu_custom_call.1} parent=43 // pred_region
          %s315 = sand.u32 %s33, 1
          %s316 = scalar_lea.sflag [#allocation4], %s315
          %s317 = sand.u32 %s33, 1
          %s318 = smul.addr %s317, 32
          %s319 = scalar_lea.vmem [#allocation3], %s318
          %s321 = ssub.s32 512, 512
          %322 = vsyncadd %s316, %s321
          %s323 = smul.addr %s23, 4
          %s324 = smul.addr %s323, 128
          %s325 = scalar_lea.hbm %s0, %s324
          %s326 = sshll.u32 %s319, 4
          %s327 = int_to_ptr.vmem [resolvable:$true] %s326
          %332 = dma.hbm_to_vmem [thread:$0]  %s325, 512, %s327, %s316, 256, 256, 16
        $region48: #{tpu_custom_call.1} parent=43 // pred_fallthru
          _
      $region44: #{tpu_custom_call.1} parent=5 // pred_fallthru
        _
      %p333 = scmp.le.s32.totalorder 1, %s23
      %p334 = scmp.lt.s32.totalorder %s23, 3
      %p335 = pnand %p333, %p334
      %p336 = pneg %p335
      // Predicated region
      $region49: #{tpu_custom_call.1} parent=5 // pred_check
        _
      $region50: #{tpu_custom_call.1} parent=5 // pred_check_branch
        %338 = sbr.rel (%p335) target = $region52
      $region51: #{tpu_custom_call.1} parent=5 // pred_region
        %s339 = ssub.s32 %s23, 1
        %s340 = sand.u32 %s36, 1
        %s341 = scalar_lea.sflag [#allocation4], %s340
        %s342 = sand.u32 %s36, 1
        %s343 = smul.addr %s342, 32
        %s344 = scalar_lea.vmem [#allocation3], %s343
        // Predicated region
        $region53: #{tpu_custom_call.1} parent=51 // pred_check
          %p345 = pneg %p49
        $region54: #{tpu_custom_call.1} parent=51 // pred_check_branch
          %347 = sbr.rel (%p345) target = $region56
        $region55: #{tpu_custom_call.1} parent=51 // pred_region
          %348 = dma.done %s341, 512
        $region56: #{tpu_custom_call.1} parent=51 // pred_fallthru
          _
        // Predicated region
        $region57: #{tpu_custom_call.1} parent=51 // pred_check
          %p349 = pneg %p112
        $region58: #{tpu_custom_call.1} parent=51 // pred_check_branch
          %351 = sbr.rel (%p349) target = $region60
        $region59: #{tpu_custom_call.1} parent=51 // pred_region
          %352 = dma.done [#allocation7], 512
        $region60: #{tpu_custom_call.1} parent=51 // pred_fallthru
          _
        // Predicated region
        $region61: #{tpu_custom_call.1} parent=51 // pred_check
          %p353 = pneg %p133
        $region62: #{tpu_custom_call.1} parent=51 // pred_check_branch
          %355 = sbr.rel (%p353) target = $region64
        $region63: #{tpu_custom_call.1} parent=51 // pred_region
          %356 = dma.done [#allocation7], 896
        $region64: #{tpu_custom_call.1} parent=51 // pred_fallthru
          _
        // Predicated region
        $region65: #{tpu_custom_call.1} parent=51 // pred_check
          %p357 = pneg %p154
        $region66: #{tpu_custom_call.1} parent=51 // pred_check_branch
          %359 = sbr.rel (%p357) target = $region68
        $region67: #{tpu_custom_call.1} parent=51 // pred_region
          %360 = dma.done [#allocation10], 4096
        $region68: #{tpu_custom_call.1} parent=51 // pred_fallthru
          _
        // Predicated region
        $region69: #{tpu_custom_call.1} parent=51 // pred_check
          %p361 = pneg %p175
        $region70: #{tpu_custom_call.1} parent=51 // pred_check_branch
          %363 = sbr.rel (%p361) target = $region72
        $region71: #{tpu_custom_call.1} parent=51 // pred_region
          %364 = dma.done [#allocation10], 4096
        $region72: #{tpu_custom_call.1} parent=51 // pred_fallthru
          _
        // Predicated region
        $region73: #{tpu_custom_call.1} parent=51 // pred_check
          %p365 = pneg %p196
        $region74: #{tpu_custom_call.1} parent=51 // pred_check_branch
          %367 = sbr.rel (%p365) target = $region76
        $region75: #{tpu_custom_call.1} parent=51 // pred_region
          %368 = dma.done [#allocation13], 4096
        $region76: #{tpu_custom_call.1} parent=51 // pred_fallthru
          _
        %s369 = sand.u32 %s36, 1
        %s370 = scalar_lea.sflag [#allocation4], %s369
        %s371 = sand.u32 %s36, 1
        %s372 = smul.addr %s371, 32
        %s373 = scalar_lea.vmem [#allocation3], %s372
        %p374 = pneg %p49
        %p375 = pneg %p46
        %p376 = pneg %p70
        %p377 = pneg %p67
        %p378 = pneg %p91
        %p379 = pneg %p88
        %p380 = pneg %p112
        %p381 = pneg %p109
        %p382 = pneg %p133
        %p383 = pneg %p130
        %p384 = pneg %p154
        %p385 = pneg %p151
        %p386 = pneg %p175
        %p387 = pneg %p172
        %p388 = pneg %p196
        %p389 = pneg %p193
        %p390 = pneg %p222
        %p391 = pneg %p219
        %s392 = sand.u32 %s209, 1
        %s393 = scalar_lea.sflag [#allocation5], %s392
        %s394 = sand.u32 %s209, 1
        %s395 = smul.addr %s394, 32
        %s396 = scalar_lea.vmem [#allocation14], %s395
        %v397 = vld [vmem:[%s344] sm:$0xff]
        %v398 = vld [vmem:[%s344 + $0x8] sm:$0xff]
        %v399 = vld [vmem:[%s344 + $0x10] sm:$0xff]
        %v400 = vld [vmem:[%s344 + $0x18] sm:$0xff]
        %v401 = vadd.f32 %v397, %v399
        %v402 = vrot.slane %v401, 4
        %v403 = vadd.f32 %v401, %v402
        %v404 = vrot.slane %v403, 2
        %v405 = vadd.f32 %v403, %v404
        %v406 = vrot.slane %v405, 1
        %v407 = vadd.f32 %v405, %v406
        %v408 = vadd.f32 %v398, %v400
        %v409 = vrot.slane %v408, 4
        %v410 = vadd.f32 %v408, %v409
        %v411 = vrot.slane %v410, 2
        %v412 = vadd.f32 %v410, %v411
        %v413 = vrot.slane %v412, 1
        %v414 = vadd.f32 %v412, %v413
        %v415 = vld [vmem:[#allocation6] sm:$0xff]
        %v416 = vld [vmem:[#allocation6 + $0x8] sm:$0xff]
        %v417 = vld [vmem:[#allocation6 + $0x10] sm:$0xff]
        %v418 = vld [vmem:[#allocation6 + $0x18] sm:$0xff]
        %v419 = vmul.f32 %v407, %v415
        %v420 = vmul.f32 %v414, %v416
        %v421 = vmul.f32 %v407, %v417
        %v422 = vmul.f32 %v414, %v418
        %v423 = vadd.f32 %v419, %v420
        %424 = vadd.xlane.f32.xlu0 %v423
        %v425 = vpop.xlane.xlu0 %424
        %v426 = vadd.f32 %v421, %v422
        %427 = vadd.xlane.f32.xlu0 %v426
        %v428 = vpop.xlane.xlu0 %427
        %v429 = vmul.f32 %v425, 0.00390625
        %v430 = vmul.f32 %v428, 0.00390625
        %v431 = vld [vmem:[%s1] sm:$0xff]
        %v432 = vld [vmem:[%s1 + $0x8] sm:$0xff]
        %v433 = vmul.f32 %v429, %v431
        %v434 = vmul.f32 %v430, %v432
        %vm435 = vcmask 31744
        %v436 = vsel %vm435, %v433, 0.0
        %v437 = vsel %vm435, %v434, 0.0
        %v438 = vadd.f32 %v436, %v437
        %v439 = vrot.slane %v438, 4
        %v440 = vadd.f32 %v438, %v439
        %v441 = vrot.slane %v440, 2
        %v442 = vadd.f32 %v440, %v441
        %v443 = vrot.slane %v442, 1
        %v444 = vadd.f32 %v442, %v443
        %v445 = vmax.f32 %v444, 0.0
        %447 = vbcast.lane.b32.xlu0 %v445, 256
        %v448 = vpop.permute.xlu0 %447
        %v449 = vld [vmem:[%s2] sm:$0xf]
        %v450 = vmul.f32 %v448, %v449
        %vm451 = vcmask 125952
        %v452 = vsel %vm451, %v450, 0.0
        %v453 = vrot.slane %v452, 4
        %v454 = vadd.f32 %v452, %v453
        %v455 = vrot.slane %v454, 2
        %v456 = vadd.f32 %v454, %v455
        %v457 = vrot.slane %v456, 1
        %v458 = vadd.f32 %v456, %v457
        %v459 = vxor.u32 %v458, 2147483648
        %v460 = vmul.f32 %v459, 1.442695
        %v461 = vpow.pop %v460
        %v462 = vadd.f32 %v461, 1.0
        %v463 = vrcp.pop %v462
        %v464 = vmul.f32 1.0, %v463
        %466 = vbcast.lane.b32.xlu0 %v464, 256
        %v467 = vpop.permute.xlu0 %466
        %s469 = sor.u32 256, 8
        %470 = vbcast.lane.b32.xlu0 %v464, %s469
        %v471 = vpop.permute.xlu0 %470
        %v472 = vmul.f32 %v467, %v415
        %v473 = vmul.f32 %v467, %v416
        %v474 = vmul.f32 %v471, %v417
        %v475 = vmul.f32 %v471, %v418
        %v476 = vadd.f32 %v472, %v474
        %v477 = vrot.slane %v476, 4
        %v478 = vadd.f32 %v476, %v477
        %v479 = vrot.slane %v478, 2
        %v480 = vadd.f32 %v478, %v479
        %v481 = vrot.slane %v480, 1
        %v482 = vadd.f32 %v480, %v481
        %v483 = vadd.f32 %v473, %v475
        %v484 = vrot.slane %v483, 4
        %v485 = vadd.f32 %v483, %v484
        %v486 = vrot.slane %v485, 2
        %v487 = vadd.f32 %v485, %v486
        %v488 = vrot.slane %v487, 1
        %v489 = vadd.f32 %v487, %v488
        %v490 = vmul.f32 %v397, %v482
        %v491 = vmul.f32 %v398, %v489
        %v492 = vmul.f32 %v399, %v482
        %v493 = vmul.f32 %v400, %v489
        %494 = vrot.lane.b32.xlu0 %v490, 127
        %v495 = vpop.permute.xlu0 %494
        %496 = vrot.lane.b32.xlu0 %v492, 127
        %v497 = vpop.permute.xlu0 %496
        %498 = vrot.lane.b32.xlu0 %v491, 127
        %v499 = vpop.permute.xlu0 %498
        %500 = vrot.lane.b32.xlu0 %v493, 127
        %v501 = vpop.permute.xlu0 %500
        %v502 = vlaneseq
        %v503 = vand.u32 %v502, 127
        %vm504 = vcmp.lt.s32.totalorder %v503, 127
        %v505 = vsel %vm504, %v495, %v499
        %v506 = vsel %vm504, %v497, %v501
        %v507 = vsel %vm504, %v499, %v495
        %v508 = vsel %vm504, %v501, %v497
        %v509 = vmax.f32 %v490, %v505
        %v510 = vmax.f32 %v491, %v507
        %v511 = vmax.f32 %v492, %v506
        %v512 = vmax.f32 %v493, %v508
        %513 = vrot.lane.b32.xlu0 %v509, 126
        %v514 = vpop.permute.xlu0 %513
        %515 = vrot.lane.b32.xlu0 %v511, 126
        %v516 = vpop.permute.xlu0 %515
        %517 = vrot.lane.b32.xlu0 %v510, 126
        %v518 = vpop.permute.xlu0 %517
        %519 = vrot.lane.b32.xlu0 %v512, 126
        %v520 = vpop.permute.xlu0 %519
        %vm521 = vcmp.lt.s32.totalorder %v503, 126
        %v522 = vsel %vm521, %v514, %v518
        %v523 = vsel %vm521, %v516, %v520
        %v524 = vsel %vm521, %v518, %v514
        %v525 = vsel %vm521, %v520, %v516
        %v526 = vmax.f32 %v509, %v522
        %v527 = vmax.f32 %v510, %v524
        %v528 = vmax.f32 %v511, %v523
        %v529 = vmax.f32 %v512, %v525
        %530 = vrot.lane.b32.xlu0 %v526, 124
        %v531 = vpop.permute.xlu0 %530
        %532 = vrot.lane.b32.xlu0 %v528, 124
        %v533 = vpop.permute.xlu0 %532
        %534 = vrot.lane.b32.xlu0 %v527, 124
        %v535 = vpop.permute.xlu0 %534
        %536 = vrot.lane.b32.xlu0 %v529, 124
        %v537 = vpop.permute.xlu0 %536
        %vm538 = vcmp.lt.s32.totalorder %v503, 124
        %v539 = vsel %vm538, %v531, %v535
        %v540 = vsel %vm538, %v533, %v537
        %v541 = vsel %vm538, %v535, %v531
        %v542 = vsel %vm538, %v537, %v533
        %v543 = vmax.f32 %v526, %v539
        %v544 = vmax.f32 %v527, %v541
        %v545 = vmax.f32 %v528, %v540
        %v546 = vmax.f32 %v529, %v542
        %547 = vrot.lane.b32.xlu0 %v543, 120
        %v548 = vpop.permute.xlu0 %547
        %549 = vrot.lane.b32.xlu0 %v545, 120
        %v550 = vpop.permute.xlu0 %549
        %551 = vrot.lane.b32.xlu0 %v544, 120
        %v552 = vpop.permute.xlu0 %551
        %553 = vrot.lane.b32.xlu0 %v546, 120
        %v554 = vpop.permute.xlu0 %553
        %vm555 = vcmp.lt.s32.totalorder %v503, 120
        %v556 = vsel %vm555, %v548, %v552
        %v557 = vsel %vm555, %v550, %v554
        %v558 = vsel %vm555, %v552, %v548
        %v559 = vsel %vm555, %v554, %v550
        %v560 = vmax.f32 %v543, %v556
        %v561 = vmax.f32 %v544, %v558
        %v562 = vmax.f32 %v545, %v557
        %v563 = vmax.f32 %v546, %v559
        %v564 = vld [vmem:[#allocation9] sm:$0xff]
        %v565 = vld [vmem:[#allocation9 + $0x8] sm:$0xff]
        %v566 = vld [vmem:[#allocation9 + $0x10] sm:$0xff]
        %v567 = vld [vmem:[#allocation9 + $0x18] sm:$0xff]
        %v568 = vld [vmem:[#allocation9 + $0x20] sm:$0xff]
        %v569 = vld [vmem:[#allocation9 + $0x28] sm:$0xff]
        %v570 = vld [vmem:[#allocation9 + $0x30] sm:$0xff]
        %v571 = vld [vmem:[#allocation9 + $0x38] sm:$0xff]
        %v572 = vld [vmem:[#allocation9 + $0x40] sm:$0xff]
        %v573 = vld [vmem:[#allocation9 + $0x48] sm:$0xff]
        %v574 = vld [vmem:[#allocation9 + $0x50] sm:$0xff]
        %v575 = vld [vmem:[#allocation9 + $0x58] sm:$0xff]
        %v576 = vld [vmem:[#allocation9 + $0x60] sm:$0xff]
        %v577 = vld [vmem:[#allocation9 + $0x68] sm:$0xff]
        %v578 = vld [vmem:[#allocation9 + $0x70] sm:$0xff]
        %v579 = vld [vmem:[#allocation9 + $0x78] sm:$0xff]
        %v580 = vld [vmem:[#allocation9 + $0x80] sm:$0xff]
        %v581 = vld [vmem:[#allocation9 + $0x88] sm:$0xff]
        %v582 = vld [vmem:[#allocation9 + $0x90] sm:$0xff]
        %v583 = vld [vmem:[#allocation9 + $0x98] sm:$0xff]
        %v584 = vld [vmem:[#allocation9 + $0xa0] sm:$0xff]
        %v585 = vld [vmem:[#allocation9 + $0xa8] sm:$0xff]
        %v586 = vld [vmem:[#allocation9 + $0xb0] sm:$0xff]
        %v587 = vld [vmem:[#allocation9 + $0xb8] sm:$0xff]
        %v588 = vld [vmem:[#allocation9 + $0xc0] sm:$0xff]
        %v589 = vld [vmem:[#allocation9 + $0xc8] sm:$0xff]
        %v590 = vld [vmem:[#allocation9 + $0xd0] sm:$0xff]
        %v591 = vld [vmem:[#allocation9 + $0xd8] sm:$0xff]
        %v592 = vld [vmem:[#allocation9 + $0xe0] sm:$0xff]
        %v593 = vld [vmem:[#allocation9 + $0xe8] sm:$0xff]
        %v594 = vld [vmem:[#allocation9 + $0xf0] sm:$0xff]
        %v595 = vld [vmem:[#allocation9 + $0xf8] sm:$0xff]
        %v596 = vld [vmem:[#allocation11] sm:$0xff]
        %v597 = vld [vmem:[#allocation11 + $0x8] sm:$0xff]
        %v598 = vld [vmem:[#allocation11 + $0x10] sm:$0xff]
        %v599 = vld [vmem:[#allocation11 + $0x18] sm:$0xff]
        %v600 = vld [vmem:[#allocation11 + $0x20] sm:$0xff]
        %v601 = vld [vmem:[#allocation11 + $0x28] sm:$0xff]
        %v602 = vld [vmem:[#allocation11 + $0x30] sm:$0xff]
        %v603 = vld [vmem:[#allocation11 + $0x38] sm:$0xff]
        %v604 = vld [vmem:[#allocation11 + $0x40] sm:$0xff]
        %v605 = vld [vmem:[#allocation11 + $0x48] sm:$0xff]
        %v606 = vld [vmem:[#allocation11 + $0x50] sm:$0xff]
        %v607 = vld [vmem:[#allocation11 + $0x58] sm:$0xff]
        %v608 = vld [vmem:[#allocation11 + $0x60] sm:$0xff]
        %v609 = vld [vmem:[#allocation11 + $0x68] sm:$0xff]
        %v610 = vld [vmem:[#allocation11 + $0x70] sm:$0xff]
        %v611 = vld [vmem:[#allocation11 + $0x78] sm:$0xff]
        %v612 = vld [vmem:[#allocation11 + $0x80] sm:$0xff]
        %v613 = vld [vmem:[#allocation11 + $0x88] sm:$0xff]
        %v614 = vld [vmem:[#allocation11 + $0x90] sm:$0xff]
        %v615 = vld [vmem:[#allocation11 + $0x98] sm:$0xff]
        %v616 = vld [vmem:[#allocation11 + $0xa0] sm:$0xff]
        %v617 = vld [vmem:[#allocation11 + $0xa8] sm:$0xff]
        %v618 = vld [vmem:[#allocation11 + $0xb0] sm:$0xff]
        %v619 = vld [vmem:[#allocation11 + $0xb8] sm:$0xff]
        %v620 = vld [vmem:[#allocation11 + $0xc0] sm:$0xff]
        %v621 = vld [vmem:[#allocation11 + $0xc8] sm:$0xff]
        %v622 = vld [vmem:[#allocation11 + $0xd0] sm:$0xff]
        %v623 = vld [vmem:[#allocation11 + $0xd8] sm:$0xff]
        %v624 = vld [vmem:[#allocation11 + $0xe0] sm:$0xff]
        %v625 = vld [vmem:[#allocation11 + $0xe8] sm:$0xff]
        %v626 = vld [vmem:[#allocation11 + $0xf0] sm:$0xff]
        %v627 = vld [vmem:[#allocation11 + $0xf8] sm:$0xff]
        %628 = vmatprep.subr.mxu0 0.0
        %629 = vmatpush1.msra.mxu0 %v596
        %630 = vmatprep.subr.mxu0 0.0
        %631 = vmatpush1.msra.mxu0 %v597
        %632 = vmatprep.subr.mxu0 0.0
        %633 = vmatpush1.msra.mxu0 %v598
        %634 = vmatprep.subr.mxu0 0.0
        %635 = vmatpush1.msra.mxu0 %v599
        %636 = vmatprep.subr.mxu0 0.0
        %637 = vmatpush1.msra.mxu0 %v600
        %638 = vmatprep.subr.mxu0 0.0
        %639 = vmatpush1.msra.mxu0 %v601
        %640 = vmatprep.subr.mxu0 0.0
        %641 = vmatpush1.msra.mxu0 %v602
        %642 = vmatprep.subr.mxu0 0.0
        %643 = vmatpush1.msra.mxu0 %v603
        %644 = vmatprep.subr.mxu0 0.0
        %645 = vmatpush1.msra.mxu0 %v604
        %646 = vmatprep.subr.mxu0 0.0
        %647 = vmatpush1.msra.mxu0 %v605
        %648 = vmatprep.subr.mxu0 0.0
        %649 = vmatpush1.msra.mxu0 %v606
        %650 = vmatprep.subr.mxu0 0.0
        %651 = vmatpush1.msra.mxu0 %v607
        %652 = vmatprep.subr.mxu0 0.0
        %653 = vmatpush1.msra.mxu0 %v608
        %654 = vmatprep.subr.mxu0 0.0
        %655 = vmatpush1.msra.mxu0 %v609
        %656 = vmatprep.subr.mxu0 0.0
        %657 = vmatpush1.msra.mxu0 %v610
        %658 = vmatprep.subr.mxu0 0.0
        %659 = vmatpush1.msra.mxu0 %v611
        %660 = vmatprep.subr.mxu0 0.0
        %661 = vmatpush1.msra.mxu0 %v612
        %662 = vmatprep.subr.mxu0 0.0
        %663 = vmatpush1.msra.mxu0 %v613
        %664 = vmatprep.subr.mxu0 0.0
        %665 = vmatpush1.msra.mxu0 %v614
        %666 = vmatprep.subr.mxu0 0.0
        %667 = vmatpush1.msra.mxu0 %v615
        %668 = vmatprep.subr.mxu0 0.0
        %669 = vmatpush1.msra.mxu0 %v616
        %670 = vmatprep.subr.mxu0 0.0
        %671 = vmatpush1.msra.mxu0 %v617
        %672 = vmatprep.subr.mxu0 0.0
        %673 = vmatpush1.msra.mxu0 %v618
        %674 = vmatprep.subr.mxu0 0.0
        %675 = vmatpush1.msra.mxu0 %v619
        %676 = vmatprep.subr.mxu0 0.0
        %677 = vmatpush1.msra.mxu0 %v620
        %678 = vmatprep.subr.mxu0 0.0
        %679 = vmatpush1.msra.mxu0 %v621
        %680 = vmatprep.subr.mxu0 0.0
        %681 = vmatpush1.msra.mxu0 %v622
        %682 = vmatprep.subr.mxu0 0.0
        %683 = vmatpush1.msra.mxu0 %v623
        %684 = vmatprep.subr.mxu0 0.0
        %685 = vmatpush1.msra.mxu0 %v624
        %686 = vmatprep.subr.mxu0 0.0
        %687 = vmatpush1.msra.mxu0 %v625
        %688 = vmatprep.subr.mxu0 0.0
        %689 = vmatpush1.msra.mxu0 %v626
        %690 = vmatprep.subr.mxu0 0.0
        %691 = vmatpush1.msra.mxu0 %v627
        %692 = vmatprep.mubr.f32.mxu0 %v491
        %693 = vmatmul.mubr.f32.gmra.mrb[0].mxu0 %v490
        %v694 = vpop.f32.mrb[0].mxu0
        %v695 = vadd.f32 0.0, %v694
        %v696 = vpop.f32.mrb[0].mxu0
        %697 = vmatprep.mubr.f32.mxu0 %v493
        %698 = vmatmul.mubr.f32.gmra.mrb[0].mxu0 %v492
        %v699 = vpop.f32.mrb[0].mxu0
        %v700 = vadd.f32 0.0, %v699
        %v701 = vpop.f32.mrb[0].mxu0
        %702 = vdwg.mxu0
        %703 = vmatprep.subr.mxu0 0.0
        %704 = vmatpush1.msra.mxu0 %v564
        %705 = vmatprep.subr.mxu0 0.0
        %706 = vmatpush1.msra.mxu0 %v565
        %707 = vmatprep.subr.mxu0 0.0
        %708 = vmatpush1.msra.mxu0 %v566
        %709 = vmatprep.subr.mxu0 0.0
        %710 = vmatpush1.msra.mxu0 %v567
        %711 = vmatprep.subr.mxu0 0.0
        %712 = vmatpush1.msra.mxu0 %v568
        %713 = vmatprep.subr.mxu0 0.0
        %714 = vmatpush1.msra.mxu0 %v569
        %715 = vmatprep.subr.mxu0 0.0
        %716 = vmatpush1.msra.mxu0 %v570
        %717 = vmatprep.subr.mxu0 0.0
        %718 = vmatpush1.msra.mxu0 %v571
        %719 = vmatprep.subr.mxu0 0.0
        %720 = vmatpush1.msra.mxu0 %v572
        %721 = vmatprep.subr.mxu0 0.0
        %722 = vmatpush1.msra.mxu0 %v573
        %723 = vmatprep.subr.mxu0 0.0
        %724 = vmatpush1.msra.mxu0 %v574
        %725 = vmatprep.subr.mxu0 0.0
        %726 = vmatpush1.msra.mxu0 %v575
        %727 = vmatprep.subr.mxu0 0.0
        %728 = vmatpush1.msra.mxu0 %v576
        %729 = vmatprep.subr.mxu0 0.0
        %730 = vmatpush1.msra.mxu0 %v577
        %731 = vmatprep.subr.mxu0 0.0
        %732 = vmatpush1.msra.mxu0 %v578
        %733 = vmatprep.subr.mxu0 0.0
        %734 = vmatpush1.msra.mxu0 %v579
        %735 = vmatprep.subr.mxu0 0.0
        %736 = vmatpush1.msra.mxu0 %v580
        %737 = vmatprep.subr.mxu0 0.0
        %738 = vmatpush1.msra.mxu0 %v581
        %739 = vmatprep.subr.mxu0 0.0
        %740 = vmatpush1.msra.mxu0 %v582
        %741 = vmatprep.subr.mxu0 0.0
        %742 = vmatpush1.msra.mxu0 %v583
        %743 = vmatprep.subr.mxu0 0.0
        %744 = vmatpush1.msra.mxu0 %v584
        %745 = vmatprep.subr.mxu0 0.0
        %746 = vmatpush1.msra.mxu0 %v585
        %747 = vmatprep.subr.mxu0 0.0
        %748 = vmatpush1.msra.mxu0 %v586
        %749 = vmatprep.subr.mxu0 0.0
        %750 = vmatpush1.msra.mxu0 %v587
        %751 = vmatprep.subr.mxu0 0.0
        %752 = vmatpush1.msra.mxu0 %v588
        %753 = vmatprep.subr.mxu0 0.0
        %754 = vmatpush1.msra.mxu0 %v589
        %755 = vmatprep.subr.mxu0 0.0
        %756 = vmatpush1.msra.mxu0 %v590
        %757 = vmatprep.subr.mxu0 0.0
        %758 = vmatpush1.msra.mxu0 %v591
        %759 = vmatprep.subr.mxu0 0.0
        %760 = vmatpush1.msra.mxu0 %v592
        %761 = vmatprep.subr.mxu0 0.0
        %762 = vmatpush1.msra.mxu0 %v593
        %763 = vmatprep.subr.mxu0 0.0
        %764 = vmatpush1.msra.mxu0 %v594
        %765 = vmatprep.subr.mxu0 0.0
        %766 = vmatpush1.msra.mxu0 %v595
        %767 = vmatprep.mubr.f32.mxu0 %v561
        %768 = vmatmul.mubr.f32.gmra.mrb[0].mxu0 %v560
        %v769 = vpop.f32.mrb[0].mxu0
        %v770 = vadd.f32 %v695, %v769
        %v771 = vpop.f32.mrb[0].mxu0
        %772 = vmatprep.mubr.f32.mxu0 %v563
        %773 = vmatmul.mubr.f32.gmra.mrb[0].mxu0 %v562
        %v774 = vpop.f32.mrb[0].mxu0
        %v775 = vadd.f32 %v700, %v774
        %v776 = vpop.f32.mrb[0].mxu0
        %777 = vdwg.mxu0
        %778 = vst [vmem:[#allocation2] sm:$0xff] 0.0
        %779 = vst [vmem:[#allocation2 + $0x8] sm:$0xff] 0.0
        %780 = vst [vmem:[#allocation2 + $0x10] sm:$0xff] 0.0
        %781 = vst [vmem:[#allocation2 + $0x18] sm:$0xff] 0.0
        %782 = vst [vmem:[#allocation2 + $0x8] sm:$0xff] %v770
        %783 = vst [vmem:[#allocation2 + $0x10] sm:$0xff] %v775
        %v784 = vld [vmem:[#allocation2 + $0x5] sm:$0xff]
        %v785 = vld [vmem:[#allocation2 + $0xd] sm:$0xff]
        %v786 = vld [vmem:[#allocation8] sm:$0x1]
        %v787 = vlaneseq
        %v788 = vshrl.u32 %v787, 7
        %v789 = vsub.s32 0, %v788
        %v790 = vrot.slane %v786, %v789
        %v791 = vmul.f32 %v784, %v790
        %v792 = vmul.f32 %v785, %v790
        %v793 = vadd.f32 %v791, 0.0
        %v794 = vadd.f32 %v792, 0.0
        %795 = vrot.lane.b32.xlu0 %v784, 127
        %v796 = vpop.permute.xlu0 %795
        %797 = vrot.lane.b32.xlu0 %v785, 127
        %v798 = vpop.permute.xlu0 %797
        %v799 = vld [vmem:[#allocation8 + $0x1] sm:$0x1]
        %v800 = vlaneseq
        %v801 = vshrl.u32 %v800, 7
        %v802 = vsub.s32 0, %v801
        %v803 = vrot.slane %v799, %v802
        %v804 = vmul.f32 %v796, %v803
        %v805 = vmul.f32 %v798, %v803
        %v806 = vadd.f32 %v793, %v804
        %v807 = vadd.f32 %v794, %v805
        %808 = vrot.lane.b32.xlu0 %v784, 126
        %v809 = vpop.permute.xlu0 %808
        %810 = vrot.lane.b32.xlu0 %v785, 126
        %v811 = vpop.permute.xlu0 %810
        %v812 = vld [vmem:[#allocation8 + $0x2] sm:$0x1]
        %v813 = vlaneseq
        %v814 = vshrl.u32 %v813, 7
        %v815 = vsub.s32 0, %v814
        %v816 = vrot.slane %v812, %v815
        %v817 = vmul.f32 %v809, %v816
        %v818 = vmul.f32 %v811, %v816
        %v819 = vadd.f32 %v806, %v817
        %v820 = vadd.f32 %v807, %v818
        %821 = vrot.lane.b32.xlu0 %v784, 125
        %v822 = vpop.permute.xlu0 %821
        %823 = vrot.lane.b32.xlu0 %v785, 125
        %v824 = vpop.permute.xlu0 %823
        %v825 = vld [vmem:[#allocation8 + $0x3] sm:$0x1]
        %v826 = vlaneseq
        %v827 = vshrl.u32 %v826, 7
        %v828 = vsub.s32 0, %v827
        %v829 = vrot.slane %v825, %v828
        %v830 = vmul.f32 %v822, %v829
        %v831 = vmul.f32 %v824, %v829
        %v832 = vadd.f32 %v819, %v830
        %v833 = vadd.f32 %v820, %v831
        %834 = vrot.lane.b32.xlu0 %v784, 124
        %v835 = vpop.permute.xlu0 %834
        %836 = vrot.lane.b32.xlu0 %v785, 124
        %v837 = vpop.permute.xlu0 %836
        %v838 = vld [vmem:[#allocation8 + $0x4] sm:$0x1]
        %v839 = vlaneseq
        %v840 = vshrl.u32 %v839, 7
        %v841 = vsub.s32 0, %v840
        %v842 = vrot.slane %v838, %v841
        %v843 = vmul.f32 %v835, %v842
        %v844 = vmul.f32 %v837, %v842
        %v845 = vadd.f32 %v832, %v843
        %v846 = vadd.f32 %v833, %v844
        %847 = vrot.lane.b32.xlu0 %v784, 123
        %v848 = vpop.permute.xlu0 %847
        %849 = vrot.lane.b32.xlu0 %v785, 123
        %v850 = vpop.permute.xlu0 %849
        %v851 = vld [vmem:[#allocation8 + $0x5] sm:$0x1]
        %v852 = vlaneseq
        %v853 = vshrl.u32 %v852, 7
        %v854 = vsub.s32 0, %v853
        %v855 = vrot.slane %v851, %v854
        %v856 = vmul.f32 %v848, %v855
        %v857 = vmul.f32 %v850, %v855
        %v858 = vadd.f32 %v845, %v856
        %v859 = vadd.f32 %v846, %v857
        %860 = vrot.lane.b32.xlu0 %v784, 122
        %v861 = vpop.permute.xlu0 %860
        %862 = vrot.lane.b32.xlu0 %v785, 122
        %v863 = vpop.permute.xlu0 %862
        %v864 = vld [vmem:[#allocation8 + $0x6] sm:$0x1]
        %v865 = vlaneseq
        %v866 = vshrl.u32 %v865, 7
        %v867 = vsub.s32 0, %v866
        %v868 = vrot.slane %v864, %v867
        %v869 = vmul.f32 %v861, %v868
        %v870 = vmul.f32 %v863, %v868
        %v871 = vadd.f32 %v858, %v869
        %v872 = vadd.f32 %v859, %v870
        %v873 = vld [vmem:[#allocation2 + $0x6] sm:$0xff]
        %v874 = vld [vmem:[#allocation2 + $0xe] sm:$0xff]
        %v875 = vld [vmem:[#allocation8 + $0x7] sm:$0x1]
        %v876 = vlaneseq
        %v877 = vshrl.u32 %v876, 7
        %v878 = vsub.s32 0, %v877
        %v879 = vrot.slane %v875, %v878
        %v880 = vmul.f32 %v873, %v879
        %v881 = vmul.f32 %v874, %v879
        %v882 = vadd.f32 %v871, %v880
        %v883 = vadd.f32 %v872, %v881
        %884 = vrot.lane.b32.xlu0 %v873, 127
        %v885 = vpop.permute.xlu0 %884
        %886 = vrot.lane.b32.xlu0 %v874, 127
        %v887 = vpop.permute.xlu0 %886
        %v888 = vld [vmem:[#allocation8 + $0x8] sm:$0x1]
        %v889 = vlaneseq
        %v890 = vshrl.u32 %v889, 7
        %v891 = vsub.s32 0, %v890
        %v892 = vrot.slane %v888, %v891
        %v893 = vmul.f32 %v885, %v892
        %v894 = vmul.f32 %v887, %v892
        %v895 = vadd.f32 %v882, %v893
        %v896 = vadd.f32 %v883, %v894
        %897 = vrot.lane.b32.xlu0 %v873, 126
        %v898 = vpop.permute.xlu0 %897
        %899 = vrot.lane.b32.xlu0 %v874, 126
        %v900 = vpop.permute.xlu0 %899
        %v901 = vld [vmem:[#allocation8 + $0x9] sm:$0x1]
        %v902 = vlaneseq
        %v903 = vshrl.u32 %v902, 7
        %v904 = vsub.s32 0, %v903
        %v905 = vrot.slane %v901, %v904
        %v906 = vmul.f32 %v898, %v905
        %v907 = vmul.f32 %v900, %v905
        %v908 = vadd.f32 %v895, %v906
        %v909 = vadd.f32 %v896, %v907
        %910 = vrot.lane.b32.xlu0 %v873, 125
        %v911 = vpop.permute.xlu0 %910
        %912 = vrot.lane.b32.xlu0 %v874, 125
        %v913 = vpop.permute.xlu0 %912
        %v914 = vld [vmem:[#allocation8 + $0xa] sm:$0x1]
        %v915 = vlaneseq
        %v916 = vshrl.u32 %v915, 7
        %v917 = vsub.s32 0, %v916
        %v918 = vrot.slane %v914, %v917
        %v919 = vmul.f32 %v911, %v918
        %v920 = vmul.f32 %v913, %v918
        %v921 = vadd.f32 %v908, %v919
        %v922 = vadd.f32 %v909, %v920
        %923 = vrot.lane.b32.xlu0 %v873, 124
        %v924 = vpop.permute.xlu0 %923
        %925 = vrot.lane.b32.xlu0 %v874, 124
        %v926 = vpop.permute.xlu0 %925
        %v927 = vld [vmem:[#allocation8 + $0xb] sm:$0x1]
        %v928 = vlaneseq
        %v929 = vshrl.u32 %v928, 7
        %v930 = vsub.s32 0, %v929
        %v931 = vrot.slane %v927, %v930
        %v932 = vmul.f32 %v924, %v931
        %v933 = vmul.f32 %v926, %v931
        %v934 = vadd.f32 %v921, %v932
        %v935 = vadd.f32 %v922, %v933
        %936 = vrot.lane.b32.xlu0 %v873, 123
        %v937 = vpop.permute.xlu0 %936
        %938 = vrot.lane.b32.xlu0 %v874, 123
        %v939 = vpop.permute.xlu0 %938
        %v940 = vld [vmem:[#allocation8 + $0xc] sm:$0x1]
        %v941 = vlaneseq
        %v942 = vshrl.u32 %v941, 7
        %v943 = vsub.s32 0, %v942
        %v944 = vrot.slane %v940, %v943
        %v945 = vmul.f32 %v937, %v944
        %v946 = vmul.f32 %v939, %v944
        %v947 = vadd.f32 %v934, %v945
        %v948 = vadd.f32 %v935, %v946
        %949 = vrot.lane.b32.xlu0 %v873, 122
        %v950 = vpop.permute.xlu0 %949
        %951 = vrot.lane.b32.xlu0 %v874, 122
        %v952 = vpop.permute.xlu0 %951
        %v953 = vld [vmem:[#allocation8 + $0xd] sm:$0x1]
        %v954 = vlaneseq
        %v955 = vshrl.u32 %v954, 7
        %v956 = vsub.s32 0, %v955
        %v957 = vrot.slane %v953, %v956
        %v958 = vmul.f32 %v950, %v957
        %v959 = vmul.f32 %v952, %v957
        %v960 = vadd.f32 %v947, %v958
        %v961 = vadd.f32 %v948, %v959
        %v962 = vld [vmem:[#allocation2 + $0x7] sm:$0xff]
        %v963 = vld [vmem:[#allocation2 + $0xf] sm:$0xff]
        %v964 = vld [vmem:[#allocation8 + $0xe] sm:$0x1]
        %v965 = vlaneseq
        %v966 = vshrl.u32 %v965, 7
        %v967 = vsub.s32 0, %v966
        %v968 = vrot.slane %v964, %v967
        %v969 = vmul.f32 %v962, %v968
        %v970 = vmul.f32 %v963, %v968
        %v971 = vadd.f32 %v960, %v969
        %v972 = vadd.f32 %v961, %v970
        %973 = vrot.lane.b32.xlu0 %v962, 127
        %v974 = vpop.permute.xlu0 %973
        %975 = vrot.lane.b32.xlu0 %v963, 127
        %v976 = vpop.permute.xlu0 %975
        %v977 = vld [vmem:[#allocation8 + $0xf] sm:$0x1]
        %v978 = vlaneseq
        %v979 = vshrl.u32 %v978, 7
        %v980 = vsub.s32 0, %v979
        %v981 = vrot.slane %v977, %v980
        %v982 = vmul.f32 %v974, %v981
        %v983 = vmul.f32 %v976, %v981
        %v984 = vadd.f32 %v971, %v982
        %v985 = vadd.f32 %v972, %v983
        %986 = vrot.lane.b32.xlu0 %v962, 126
        %v987 = vpop.permute.xlu0 %986
        %988 = vrot.lane.b32.xlu0 %v963, 126
        %v989 = vpop.permute.xlu0 %988
        %v990 = vld [vmem:[#allocation8 + $0x10] sm:$0x1]
        %v991 = vlaneseq
        %v992 = vshrl.u32 %v991, 7
        %v993 = vsub.s32 0, %v992
        %v994 = vrot.slane %v990, %v993
        %v995 = vmul.f32 %v987, %v994
        %v996 = vmul.f32 %v989, %v994
        %v997 = vadd.f32 %v984, %v995
        %v998 = vadd.f32 %v985, %v996
        %999 = vrot.lane.b32.xlu0 %v962, 125
        %v1000 = vpop.permute.xlu0 %999
        %1001 = vrot.lane.b32.xlu0 %v963, 125
        %v1002 = vpop.permute.xlu0 %1001
        %v1003 = vld [vmem:[#allocation8 + $0x11] sm:$0x1]
        %v1004 = vlaneseq
        %v1005 = vshrl.u32 %v1004, 7
        %v1006 = vsub.s32 0, %v1005
        %v1007 = vrot.slane %v1003, %v1006
        %v1008 = vmul.f32 %v1000, %v1007
        %v1009 = vmul.f32 %v1002, %v1007
        %v1010 = vadd.f32 %v997, %v1008
        %v1011 = vadd.f32 %v998, %v1009
        %1012 = vrot.lane.b32.xlu0 %v962, 124
        %v1013 = vpop.permute.xlu0 %1012
        %1014 = vrot.lane.b32.xlu0 %v963, 124
        %v1015 = vpop.permute.xlu0 %1014
        %v1016 = vld [vmem:[#allocation8 + $0x12] sm:$0x1]
        %v1017 = vlaneseq
        %v1018 = vshrl.u32 %v1017, 7
        %v1019 = vsub.s32 0, %v1018
        %v1020 = vrot.slane %v1016, %v1019
        %v1021 = vmul.f32 %v1013, %v1020
        %v1022 = vmul.f32 %v1015, %v1020
        %v1023 = vadd.f32 %v1010, %v1021
        %v1024 = vadd.f32 %v1011, %v1022
        %1025 = vrot.lane.b32.xlu0 %v962, 123
        %v1026 = vpop.permute.xlu0 %1025
        %1027 = vrot.lane.b32.xlu0 %v963, 123
        %v1028 = vpop.permute.xlu0 %1027
        %v1029 = vld [vmem:[#allocation8 + $0x13] sm:$0x1]
        %v1030 = vlaneseq
        %v1031 = vshrl.u32 %v1030, 7
        %v1032 = vsub.s32 0, %v1031
        %v1033 = vrot.slane %v1029, %v1032
        %v1034 = vmul.f32 %v1026, %v1033
        %v1035 = vmul.f32 %v1028, %v1033
        %v1036 = vadd.f32 %v1023, %v1034
        %v1037 = vadd.f32 %v1024, %v1035
        %1038 = vrot.lane.b32.xlu0 %v962, 122
        %v1039 = vpop.permute.xlu0 %1038
        %1040 = vrot.lane.b32.xlu0 %v963, 122
        %v1041 = vpop.permute.xlu0 %1040
        %v1042 = vld [vmem:[#allocation8 + $0x14] sm:$0x1]
        %v1043 = vlaneseq
        %v1044 = vshrl.u32 %v1043, 7
        %v1045 = vsub.s32 0, %v1044
        %v1046 = vrot.slane %v1042, %v1045
        %v1047 = vmul.f32 %v1039, %v1046
        %v1048 = vmul.f32 %v1041, %v1046
        %v1049 = vadd.f32 %v1036, %v1047
        %v1050 = vadd.f32 %v1037, %v1048
        %v1051 = vld [vmem:[#allocation2 + $0x8] sm:$0xff]
        %v1052 = vld [vmem:[#allocation2 + $0x10] sm:$0xff]
        %v1053 = vld [vmem:[#allocation8 + $0x15] sm:$0x1]
        %v1054 = vlaneseq
        %v1055 = vshrl.u32 %v1054, 7
        %v1056 = vsub.s32 0, %v1055
        %v1057 = vrot.slane %v1053, %v1056
        %v1058 = vmul.f32 %v1051, %v1057
        %v1059 = vmul.f32 %v1052, %v1057
        %v1060 = vadd.f32 %v1049, %v1058
        %v1061 = vadd.f32 %v1050, %v1059
        %1062 = vrot.lane.b32.xlu0 %v1051, 127
        %v1063 = vpop.permute.xlu0 %1062
        %1064 = vrot.lane.b32.xlu0 %v1052, 127
        %v1065 = vpop.permute.xlu0 %1064
        %v1066 = vld [vmem:[#allocation8 + $0x16] sm:$0x1]
        %v1067 = vlaneseq
        %v1068 = vshrl.u32 %v1067, 7
        %v1069 = vsub.s32 0, %v1068
        %v1070 = vrot.slane %v1066, %v1069
        %v1071 = vmul.f32 %v1063, %v1070
        %v1072 = vmul.f32 %v1065, %v1070
        %v1073 = vadd.f32 %v1060, %v1071
        %v1074 = vadd.f32 %v1061, %v1072
        %1075 = vrot.lane.b32.xlu0 %v1051, 126
        %v1076 = vpop.permute.xlu0 %1075
        %1077 = vrot.lane.b32.xlu0 %v1052, 126
        %v1078 = vpop.permute.xlu0 %1077
        %v1079 = vld [vmem:[#allocation8 + $0x17] sm:$0x1]
        %v1080 = vlaneseq
        %v1081 = vshrl.u32 %v1080, 7
        %v1082 = vsub.s32 0, %v1081
        %v1083 = vrot.slane %v1079, %v1082
        %v1084 = vmul.f32 %v1076, %v1083
        %v1085 = vmul.f32 %v1078, %v1083
        %v1086 = vadd.f32 %v1073, %v1084
        %v1087 = vadd.f32 %v1074, %v1085
        %1088 = vrot.lane.b32.xlu0 %v1051, 125
        %v1089 = vpop.permute.xlu0 %1088
        %1090 = vrot.lane.b32.xlu0 %v1052, 125
        %v1091 = vpop.permute.xlu0 %1090
        %v1092 = vld [vmem:[#allocation8 + $0x18] sm:$0x1]
        %v1093 = vlaneseq
        %v1094 = vshrl.u32 %v1093, 7
        %v1095 = vsub.s32 0, %v1094
        %v1096 = vrot.slane %v1092, %v1095
        %v1097 = vmul.f32 %v1089, %v1096
        %v1098 = vmul.f32 %v1091, %v1096
        %v1099 = vadd.f32 %v1086, %v1097
        %v1100 = vadd.f32 %v1087, %v1098
        %1101 = vrot.lane.b32.xlu0 %v1051, 124
        %v1102 = vpop.permute.xlu0 %1101
        %1103 = vrot.lane.b32.xlu0 %v1052, 124
        %v1104 = vpop.permute.xlu0 %1103
        %v1105 = vld [vmem:[#allocation8 + $0x19] sm:$0x1]
        %v1106 = vlaneseq
        %v1107 = vshrl.u32 %v1106, 7
        %v1108 = vsub.s32 0, %v1107
        %v1109 = vrot.slane %v1105, %v1108
        %v1110 = vmul.f32 %v1102, %v1109
        %v1111 = vmul.f32 %v1104, %v1109
        %v1112 = vadd.f32 %v1099, %v1110
        %v1113 = vadd.f32 %v1100, %v1111
        %1114 = vrot.lane.b32.xlu0 %v1051, 123
        %v1115 = vpop.permute.xlu0 %1114
        %1116 = vrot.lane.b32.xlu0 %v1052, 123
        %v1117 = vpop.permute.xlu0 %1116
        %v1118 = vld [vmem:[#allocation8 + $0x1a] sm:$0x1]
        %v1119 = vlaneseq
        %v1120 = vshrl.u32 %v1119, 7
        %v1121 = vsub.s32 0, %v1120
        %v1122 = vrot.slane %v1118, %v1121
        %v1123 = vmul.f32 %v1115, %v1122
        %v1124 = vmul.f32 %v1117, %v1122
        %v1125 = vadd.f32 %v1112, %v1123
        %v1126 = vadd.f32 %v1113, %v1124
        %1127 = vrot.lane.b32.xlu0 %v1051, 122
        %v1128 = vpop.permute.xlu0 %1127
        %1129 = vrot.lane.b32.xlu0 %v1052, 122
        %v1130 = vpop.permute.xlu0 %1129
        %v1131 = vld [vmem:[#allocation8 + $0x1b] sm:$0x1]
        %v1132 = vlaneseq
        %v1133 = vshrl.u32 %v1132, 7
        %v1134 = vsub.s32 0, %v1133
        %v1135 = vrot.slane %v1131, %v1134
        %v1136 = vmul.f32 %v1128, %v1135
        %v1137 = vmul.f32 %v1130, %v1135
        %v1138 = vadd.f32 %v1125, %v1136
        %v1139 = vadd.f32 %v1126, %v1137
        %v1140 = vld [vmem:[#allocation2 + $0x9] sm:$0xff]
        %v1141 = vld [vmem:[#allocation2 + $0x11] sm:$0xff]
        %v1142 = vld [vmem:[#allocation8 + $0x1c] sm:$0x1]
        %v1143 = vlaneseq
        %v1144 = vshrl.u32 %v1143, 7
        %v1145 = vsub.s32 0, %v1144
        %v1146 = vrot.slane %v1142, %v1145
        %v1147 = vmul.f32 %v1140, %v1146
        %v1148 = vmul.f32 %v1141, %v1146
        %v1149 = vadd.f32 %v1138, %v1147
        %v1150 = vadd.f32 %v1139, %v1148
        %1151 = vrot.lane.b32.xlu0 %v1140, 127
        %v1152 = vpop.permute.xlu0 %1151
        %1153 = vrot.lane.b32.xlu0 %v1141, 127
        %v1154 = vpop.permute.xlu0 %1153
        %v1155 = vld [vmem:[#allocation8 + $0x1d] sm:$0x1]
        %v1156 = vlaneseq
        %v1157 = vshrl.u32 %v1156, 7
        %v1158 = vsub.s32 0, %v1157
        %v1159 = vrot.slane %v1155, %v1158
        %v1160 = vmul.f32 %v1152, %v1159
        %v1161 = vmul.f32 %v1154, %v1159
        %v1162 = vadd.f32 %v1149, %v1160
        %v1163 = vadd.f32 %v1150, %v1161
        %1164 = vrot.lane.b32.xlu0 %v1140, 126
        %v1165 = vpop.permute.xlu0 %1164
        %1166 = vrot.lane.b32.xlu0 %v1141, 126
        %v1167 = vpop.permute.xlu0 %1166
        %v1168 = vld [vmem:[#allocation8 + $0x1e] sm:$0x1]
        %v1169 = vlaneseq
        %v1170 = vshrl.u32 %v1169, 7
        %v1171 = vsub.s32 0, %v1170
        %v1172 = vrot.slane %v1168, %v1171
        %v1173 = vmul.f32 %v1165, %v1172
        %v1174 = vmul.f32 %v1167, %v1172
        %v1175 = vadd.f32 %v1162, %v1173
        %v1176 = vadd.f32 %v1163, %v1174
        %1177 = vrot.lane.b32.xlu0 %v1140, 125
        %v1178 = vpop.permute.xlu0 %1177
        %1179 = vrot.lane.b32.xlu0 %v1141, 125
        %v1180 = vpop.permute.xlu0 %1179
        %v1181 = vld [vmem:[#allocation8 + $0x1f] sm:$0x1]
        %v1182 = vlaneseq
        %v1183 = vshrl.u32 %v1182, 7
        %v1184 = vsub.s32 0, %v1183
        %v1185 = vrot.slane %v1181, %v1184
        %v1186 = vmul.f32 %v1178, %v1185
        %v1187 = vmul.f32 %v1180, %v1185
        %v1188 = vadd.f32 %v1175, %v1186
        %v1189 = vadd.f32 %v1176, %v1187
        %1190 = vrot.lane.b32.xlu0 %v1140, 124
        %v1191 = vpop.permute.xlu0 %1190
        %1192 = vrot.lane.b32.xlu0 %v1141, 124
        %v1193 = vpop.permute.xlu0 %1192
        %v1194 = vld [vmem:[#allocation8 + $0x20] sm:$0x1]
        %v1195 = vlaneseq
        %v1196 = vshrl.u32 %v1195, 7
        %v1197 = vsub.s32 0, %v1196
        %v1198 = vrot.slane %v1194, %v1197
        %v1199 = vmul.f32 %v1191, %v1198
        %v1200 = vmul.f32 %v1193, %v1198
        %v1201 = vadd.f32 %v1188, %v1199
        %v1202 = vadd.f32 %v1189, %v1200
        %1203 = vrot.lane.b32.xlu0 %v1140, 123
        %v1204 = vpop.permute.xlu0 %1203
        %1205 = vrot.lane.b32.xlu0 %v1141, 123
        %v1206 = vpop.permute.xlu0 %1205
        %v1207 = vld [vmem:[#allocation8 + $0x21] sm:$0x1]
        %v1208 = vlaneseq
        %v1209 = vshrl.u32 %v1208, 7
        %v1210 = vsub.s32 0, %v1209
        %v1211 = vrot.slane %v1207, %v1210
        %v1212 = vmul.f32 %v1204, %v1211
        %v1213 = vmul.f32 %v1206, %v1211
        %v1214 = vadd.f32 %v1201, %v1212
        %v1215 = vadd.f32 %v1202, %v1213
        %1216 = vrot.lane.b32.xlu0 %v1140, 122
        %v1217 = vpop.permute.xlu0 %1216
        %1218 = vrot.lane.b32.xlu0 %v1141, 122
        %v1219 = vpop.permute.xlu0 %1218
        %v1220 = vld [vmem:[#allocation8 + $0x22] sm:$0x1]
        %v1221 = vlaneseq
        %v1222 = vshrl.u32 %v1221, 7
        %v1223 = vsub.s32 0, %v1222
        %v1224 = vrot.slane %v1220, %v1223
        %v1225 = vmul.f32 %v1217, %v1224
        %v1226 = vmul.f32 %v1219, %v1224
        %v1227 = vadd.f32 %v1214, %v1225
        %v1228 = vadd.f32 %v1215, %v1226
        %v1229 = vld [vmem:[#allocation2 + $0xa] sm:$0xff]
        %v1230 = vld [vmem:[#allocation2 + $0x12] sm:$0xff]
        %v1231 = vld [vmem:[#allocation8 + $0x23] sm:$0x1]
        %v1232 = vlaneseq
        %v1233 = vshrl.u32 %v1232, 7
        %v1234 = vsub.s32 0, %v1233
        %v1235 = vrot.slane %v1231, %v1234
        %v1236 = vmul.f32 %v1229, %v1235
        %v1237 = vmul.f32 %v1230, %v1235
        %v1238 = vadd.f32 %v1227, %v1236
        %v1239 = vadd.f32 %v1228, %v1237
        %1240 = vrot.lane.b32.xlu0 %v1229, 127
        %v1241 = vpop.permute.xlu0 %1240
        %1242 = vrot.lane.b32.xlu0 %v1230, 127
        %v1243 = vpop.permute.xlu0 %1242
        %v1244 = vld [vmem:[#allocation8 + $0x24] sm:$0x1]
        %v1245 = vlaneseq
        %v1246 = vshrl.u32 %v1245, 7
        %v1247 = vsub.s32 0, %v1246
        %v1248 = vrot.slane %v1244, %v1247
        %v1249 = vmul.f32 %v1241, %v1248
        %v1250 = vmul.f32 %v1243, %v1248
        %v1251 = vadd.f32 %v1238, %v1249
        %v1252 = vadd.f32 %v1239, %v1250
        %1253 = vrot.lane.b32.xlu0 %v1229, 126
        %v1254 = vpop.permute.xlu0 %1253
        %1255 = vrot.lane.b32.xlu0 %v1230, 126
        %v1256 = vpop.permute.xlu0 %1255
        %v1257 = vld [vmem:[#allocation8 + $0x25] sm:$0x1]
        %v1258 = vlaneseq
        %v1259 = vshrl.u32 %v1258, 7
        %v1260 = vsub.s32 0, %v1259
        %v1261 = vrot.slane %v1257, %v1260
        %v1262 = vmul.f32 %v1254, %v1261
        %v1263 = vmul.f32 %v1256, %v1261
        %v1264 = vadd.f32 %v1251, %v1262
        %v1265 = vadd.f32 %v1252, %v1263
        %1266 = vrot.lane.b32.xlu0 %v1229, 125
        %v1267 = vpop.permute.xlu0 %1266
        %1268 = vrot.lane.b32.xlu0 %v1230, 125
        %v1269 = vpop.permute.xlu0 %1268
        %v1270 = vld [vmem:[#allocation8 + $0x26] sm:$0x1]
        %v1271 = vlaneseq
        %v1272 = vshrl.u32 %v1271, 7
        %v1273 = vsub.s32 0, %v1272
        %v1274 = vrot.slane %v1270, %v1273
        %v1275 = vmul.f32 %v1267, %v1274
        %v1276 = vmul.f32 %v1269, %v1274
        %v1277 = vadd.f32 %v1264, %v1275
        %v1278 = vadd.f32 %v1265, %v1276
        %1279 = vrot.lane.b32.xlu0 %v1229, 124
        %v1280 = vpop.permute.xlu0 %1279
        %1281 = vrot.lane.b32.xlu0 %v1230, 124
        %v1282 = vpop.permute.xlu0 %1281
        %v1283 = vld [vmem:[#allocation8 + $0x27] sm:$0x1]
        %v1284 = vlaneseq
        %v1285 = vshrl.u32 %v1284, 7
        %v1286 = vsub.s32 0, %v1285
        %v1287 = vrot.slane %v1283, %v1286
        %v1288 = vmul.f32 %v1280, %v1287
        %v1289 = vmul.f32 %v1282, %v1287
        %v1290 = vadd.f32 %v1277, %v1288
        %v1291 = vadd.f32 %v1278, %v1289
        %1292 = vrot.lane.b32.xlu0 %v1229, 123
        %v1293 = vpop.permute.xlu0 %1292
        %1294 = vrot.lane.b32.xlu0 %v1230, 123
        %v1295 = vpop.permute.xlu0 %1294
        %v1296 = vld [vmem:[#allocation8 + $0x28] sm:$0x1]
        %v1297 = vlaneseq
        %v1298 = vshrl.u32 %v1297, 7
        %v1299 = vsub.s32 0, %v1298
        %v1300 = vrot.slane %v1296, %v1299
        %v1301 = vmul.f32 %v1293, %v1300
        %v1302 = vmul.f32 %v1295, %v1300
        %v1303 = vadd.f32 %v1290, %v1301
        %v1304 = vadd.f32 %v1291, %v1302
        %1305 = vrot.lane.b32.xlu0 %v1229, 122
        %v1306 = vpop.permute.xlu0 %1305
        %1307 = vrot.lane.b32.xlu0 %v1230, 122
        %v1308 = vpop.permute.xlu0 %1307
        %v1309 = vld [vmem:[#allocation8 + $0x29] sm:$0x1]
        %v1310 = vlaneseq
        %v1311 = vshrl.u32 %v1310, 7
        %v1312 = vsub.s32 0, %v1311
        %v1313 = vrot.slane %v1309, %v1312
        %v1314 = vmul.f32 %v1306, %v1313
        %v1315 = vmul.f32 %v1308, %v1313
        %v1316 = vadd.f32 %v1303, %v1314
        %v1317 = vadd.f32 %v1304, %v1315
        %v1318 = vld [vmem:[#allocation2 + $0xb] sm:$0xff]
        %v1319 = vld [vmem:[#allocation2 + $0x13] sm:$0xff]
        %v1320 = vld [vmem:[#allocation8 + $0x2a] sm:$0x1]
        %v1321 = vlaneseq
        %v1322 = vshrl.u32 %v1321, 7
        %v1323 = vsub.s32 0, %v1322
        %v1324 = vrot.slane %v1320, %v1323
        %v1325 = vmul.f32 %v1318, %v1324
        %v1326 = vmul.f32 %v1319, %v1324
        %v1327 = vadd.f32 %v1316, %v1325
        %v1328 = vadd.f32 %v1317, %v1326
        %1329 = vrot.lane.b32.xlu0 %v1318, 127
        %v1330 = vpop.permute.xlu0 %1329
        %1331 = vrot.lane.b32.xlu0 %v1319, 127
        %v1332 = vpop.permute.xlu0 %1331
        %v1333 = vld [vmem:[#allocation8 + $0x2b] sm:$0x1]
        %v1334 = vlaneseq
        %v1335 = vshrl.u32 %v1334, 7
        %v1336 = vsub.s32 0, %v1335
        %v1337 = vrot.slane %v1333, %v1336
        %v1338 = vmul.f32 %v1330, %v1337
        %v1339 = vmul.f32 %v1332, %v1337
        %v1340 = vadd.f32 %v1327, %v1338
        %v1341 = vadd.f32 %v1328, %v1339
        %1342 = vrot.lane.b32.xlu0 %v1318, 126
        %v1343 = vpop.permute.xlu0 %1342
        %1344 = vrot.lane.b32.xlu0 %v1319, 126
        %v1345 = vpop.permute.xlu0 %1344
        %v1346 = vld [vmem:[#allocation8 + $0x2c] sm:$0x1]
        %v1347 = vlaneseq
        %v1348 = vshrl.u32 %v1347, 7
        %v1349 = vsub.s32 0, %v1348
        %v1350 = vrot.slane %v1346, %v1349
        %v1351 = vmul.f32 %v1343, %v1350
        %v1352 = vmul.f32 %v1345, %v1350
        %v1353 = vadd.f32 %v1340, %v1351
        %v1354 = vadd.f32 %v1341, %v1352
        %1355 = vrot.lane.b32.xlu0 %v1318, 125
        %v1356 = vpop.permute.xlu0 %1355
        %1357 = vrot.lane.b32.xlu0 %v1319, 125
        %v1358 = vpop.permute.xlu0 %1357
        %v1359 = vld [vmem:[#allocation8 + $0x2d] sm:$0x1]
        %v1360 = vlaneseq
        %v1361 = vshrl.u32 %v1360, 7
        %v1362 = vsub.s32 0, %v1361
        %v1363 = vrot.slane %v1359, %v1362
        %v1364 = vmul.f32 %v1356, %v1363
        %v1365 = vmul.f32 %v1358, %v1363
        %v1366 = vadd.f32 %v1353, %v1364
        %v1367 = vadd.f32 %v1354, %v1365
        %1368 = vrot.lane.b32.xlu0 %v1318, 124
        %v1369 = vpop.permute.xlu0 %1368
        %1370 = vrot.lane.b32.xlu0 %v1319, 124
        %v1371 = vpop.permute.xlu0 %1370
        %v1372 = vld [vmem:[#allocation8 + $0x2e] sm:$0x1]
        %v1373 = vlaneseq
        %v1374 = vshrl.u32 %v1373, 7
        %v1375 = vsub.s32 0, %v1374
        %v1376 = vrot.slane %v1372, %v1375
        %v1377 = vmul.f32 %v1369, %v1376
        %v1378 = vmul.f32 %v1371, %v1376
        %v1379 = vadd.f32 %v1366, %v1377
        %v1380 = vadd.f32 %v1367, %v1378
        %1381 = vrot.lane.b32.xlu0 %v1318, 123
        %v1382 = vpop.permute.xlu0 %1381
        %1383 = vrot.lane.b32.xlu0 %v1319, 123
        %v1384 = vpop.permute.xlu0 %1383
        %v1385 = vld [vmem:[#allocation8 + $0x2f] sm:$0x1]
        %v1386 = vlaneseq
        %v1387 = vshrl.u32 %v1386, 7
        %v1388 = vsub.s32 0, %v1387
        %v1389 = vrot.slane %v1385, %v1388
        %v1390 = vmul.f32 %v1382, %v1389
        %v1391 = vmul.f32 %v1384, %v1389
        %v1392 = vadd.f32 %v1379, %v1390
        %v1393 = vadd.f32 %v1380, %v1391
        %1394 = vrot.lane.b32.xlu0 %v1318, 122
        %v1395 = vpop.permute.xlu0 %1394
        %1396 = vrot.lane.b32.xlu0 %v1319, 122
        %v1397 = vpop.permute.xlu0 %1396
        %v1398 = vld [vmem:[#allocation8 + $0x30] sm:$0x1]
        %v1399 = vlaneseq
        %v1400 = vshrl.u32 %v1399, 7
        %v1401 = vsub.s32 0, %v1400
        %v1402 = vrot.slane %v1398, %v1401
        %v1403 = vmul.f32 %v1395, %v1402
        %v1404 = vmul.f32 %v1397, %v1402
        %v1405 = vadd.f32 %v1392, %v1403
        %v1406 = vadd.f32 %v1393, %v1404
        %v1407 = vld [vmem:[#allocation12] sm:$0xff]
        %v1408 = vld [vmem:[#allocation12 + $0x8] sm:$0xff]
        %v1409 = vld [vmem:[#allocation12 + $0x10] sm:$0xff]
        %v1410 = vld [vmem:[#allocation12 + $0x18] sm:$0xff]
        %v1411 = vld [vmem:[#allocation12 + $0x20] sm:$0xff]
        %v1412 = vld [vmem:[#allocation12 + $0x28] sm:$0xff]
        %v1413 = vld [vmem:[#allocation12 + $0x30] sm:$0xff]
        %v1414 = vld [vmem:[#allocation12 + $0x38] sm:$0xff]
        %v1415 = vld [vmem:[#allocation12 + $0x40] sm:$0xff]
        %v1416 = vld [vmem:[#allocation12 + $0x48] sm:$0xff]
        %v1417 = vld [vmem:[#allocation12 + $0x50] sm:$0xff]
        %v1418 = vld [vmem:[#allocation12 + $0x58] sm:$0xff]
        %v1419 = vld [vmem:[#allocation12 + $0x60] sm:$0xff]
        %v1420 = vld [vmem:[#allocation12 + $0x68] sm:$0xff]
        %v1421 = vld [vmem:[#allocation12 + $0x70] sm:$0xff]
        %v1422 = vld [vmem:[#allocation12 + $0x78] sm:$0xff]
        %v1423 = vld [vmem:[#allocation12 + $0x80] sm:$0xff]
        %v1424 = vld [vmem:[#allocation12 + $0x88] sm:$0xff]
        %v1425 = vld [vmem:[#allocation12 + $0x90] sm:$0xff]
        %v1426 = vld [vmem:[#allocation12 + $0x98] sm:$0xff]
        %v1427 = vld [vmem:[#allocation12 + $0xa0] sm:$0xff]
        %v1428 = vld [vmem:[#allocation12 + $0xa8] sm:$0xff]
        %v1429 = vld [vmem:[#allocation12 + $0xb0] sm:$0xff]
        %v1430 = vld [vmem:[#allocation12 + $0xb8] sm:$0xff]
        %v1431 = vld [vmem:[#allocation12 + $0xc0] sm:$0xff]
        %v1432 = vld [vmem:[#allocation12 + $0xc8] sm:$0xff]
        %v1433 = vld [vmem:[#allocation12 + $0xd0] sm:$0xff]
        %v1434 = vld [vmem:[#allocation12 + $0xd8] sm:$0xff]
        %v1435 = vld [vmem:[#allocation12 + $0xe0] sm:$0xff]
        %v1436 = vld [vmem:[#allocation12 + $0xe8] sm:$0xff]
        %v1437 = vld [vmem:[#allocation12 + $0xf0] sm:$0xff]
        %v1438 = vld [vmem:[#allocation12 + $0xf8] sm:$0xff]
        %1439 = vmatprep.subr.mxu0 %v1408
        %1440 = vmatpush1.msra.mxu0 %v1407
        %1441 = vmatprep.subr.mxu0 %v1410
        %1442 = vmatpush1.msra.mxu0 %v1409
        %1443 = vmatprep.subr.mxu0 %v1412
        %1444 = vmatpush1.msra.mxu0 %v1411
        %1445 = vmatprep.subr.mxu0 %v1414
        %1446 = vmatpush1.msra.mxu0 %v1413
        %1447 = vmatprep.subr.mxu0 %v1416
        %1448 = vmatpush1.msra.mxu0 %v1415
        %1449 = vmatprep.subr.mxu0 %v1418
        %1450 = vmatpush1.msra.mxu0 %v1417
        %1451 = vmatprep.subr.mxu0 %v1420
        %1452 = vmatpush1.msra.mxu0 %v1419
        %1453 = vmatprep.subr.mxu0 %v1422
        %1454 = vmatpush1.msra.mxu0 %v1421
        %1455 = vmatprep.subr.mxu0 %v1424
        %1456 = vmatpush1.msra.mxu0 %v1423
        %1457 = vmatprep.subr.mxu0 %v1426
        %1458 = vmatpush1.msra.mxu0 %v1425
        %1459 = vmatprep.subr.mxu0 %v1428
        %1460 = vmatpush1.msra.mxu0 %v1427
        %1461 = vmatprep.subr.mxu0 %v1430
        %1462 = vmatpush1.msra.mxu0 %v1429
        %1463 = vmatprep.subr.mxu0 %v1432
        %1464 = vmatpush1.msra.mxu0 %v1431
        %1465 = vmatprep.subr.mxu0 %v1434
        %1466 = vmatpush1.msra.mxu0 %v1433
        %1467 = vmatprep.subr.mxu0 %v1436
        %1468 = vmatpush1.msra.mxu0 %v1435
        %1469 = vmatprep.subr.mxu0 %v1438
        %1470 = vmatpush1.msra.mxu0 %v1437
        %1471 = vmatprep.subr.mxu0 0.0
        %1472 = vmatpush1.msra.mxu0 0.0
        %1473 = vmatprep.subr.mxu0 0.0
        %1474 = vmatpush1.msra.mxu0 0.0
        %1475 = vmatprep.subr.mxu0 0.0
        %1476 = vmatpush1.msra.mxu0 0.0
        %1477 = vmatprep.subr.mxu0 0.0
        %1478 = vmatpush1.msra.mxu0 0.0
        %1479 = vmatprep.subr.mxu0 0.0
        %1480 = vmatpush1.msra.mxu0 0.0
        %1481 = vmatprep.subr.mxu0 0.0
        %1482 = vmatpush1.msra.mxu0 0.0
        %1483 = vmatprep.subr.mxu0 0.0
        %1484 = vmatpush1.msra.mxu0 0.0
        %1485 = vmatprep.subr.mxu0 0.0
        %1486 = vmatpush1.msra.mxu0 0.0
        %1487 = vmatprep.subr.mxu0 0.0
        %1488 = vmatpush1.msra.mxu0 0.0
        %1489 = vmatprep.subr.mxu0 0.0
        %1490 = vmatpush1.msra.mxu0 0.0
        %1491 = vmatprep.subr.mxu0 0.0
        %1492 = vmatpush1.msra.mxu0 0.0
        %1493 = vmatprep.subr.mxu0 0.0
        %1494 = vmatpush1.msra.mxu0 0.0
        %1495 = vmatprep.subr.mxu0 0.0
        %1496 = vmatpush1.msra.mxu0 0.0
        %1497 = vmatprep.subr.mxu0 0.0
        %1498 = vmatpush1.msra.mxu0 0.0
        %1499 = vmatprep.subr.mxu0 0.0
        %1500 = vmatpush1.msra.mxu0 0.0
        %1501 = vmatprep.subr.mxu0 0.0
        %1502 = vmatpush1.msra.mxu0 0.0
        %1503 = vmatprep.mubr.f32.mxu0 0.0
        %1504 = vmatmul.mubr.f32.gmra.mrb[0].mxu0 %v1405
        %v1505 = vpop.f32.mrb[0].mxu0
        %v1506 = vadd.f32 0.0, %v1505
        %v1507 = vpop.f32.mrb[0].mxu0
        %v1508 = vadd.f32 0.0, %v1507
        %1509 = vmatprep.mubr.f32.mxu0 0.0
        %1510 = vmatmul.mubr.f32.gmra.mrb[0].mxu0 %v1406
        %v1511 = vpop.f32.mrb[0].mxu0
        %v1512 = vadd.f32 0.0, %v1511
        %v1513 = vpop.f32.mrb[0].mxu0
        %v1514 = vadd.f32 0.0, %v1513
        %1515 = vdwg.mxu0
        %v1516 = vxor.u32 %v1506, 2147483648
        %v1517 = vxor.u32 %v1508, 2147483648
        %v1518 = vxor.u32 %v1512, 2147483648
        %v1519 = vxor.u32 %v1514, 2147483648
        %v1520 = vmul.f32 %v1516, 1.442695
        %v1521 = vpow.pop %v1520
        %v1522 = vmul.f32 %v1517, 1.442695
        %v1523 = vpow.pop %v1522
        %v1524 = vmul.f32 %v1518, 1.442695
        %v1525 = vpow.pop %v1524
        %v1526 = vmul.f32 %v1519, 1.442695
        %v1527 = vpow.pop %v1526
        %v1528 = vadd.f32 %v1521, 1.0
        %v1529 = vadd.f32 %v1523, 1.0
        %v1530 = vadd.f32 %v1525, 1.0
        %v1531 = vadd.f32 %v1527, 1.0
        %v1532 = vrcp.pop %v1528
        %v1533 = vmul.f32 1.0, %v1532
        %v1534 = vrcp.pop %v1529
        %v1535 = vmul.f32 1.0, %v1534
        %v1536 = vrcp.pop %v1530
        %v1537 = vmul.f32 1.0, %v1536
        %v1538 = vrcp.pop %v1531
        %v1539 = vmul.f32 1.0, %v1538
        %v1540 = vmul.f32 %v490, %v1533
        %v1541 = vmul.f32 %v491, %v1535
        %v1542 = vmul.f32 %v492, %v1537
        %v1543 = vmul.f32 %v493, %v1539
        %1544 = vst [vmem:[%s396] sm:$0xff] %v1540
        %1545 = vst [vmem:[%s396 + $0x8] sm:$0xff] %v1541
        %1546 = vst [vmem:[%s396 + $0x10] sm:$0xff] %v1542
        %1547 = vst [vmem:[%s396 + $0x18] sm:$0xff] %v1543
        %s1548 = sand.u32 %s209, 1
        %s1549 = scalar_lea.sflag [#allocation5], %s1548
        %s1550 = sand.u32 %s209, 1
        %s1551 = smul.addr %s1550, 32
        %s1552 = scalar_lea.vmem [#allocation14], %s1551
        // Predicated region
        $region77: #{tpu_custom_call.1} parent=51 // pred_check
          %p1553 = pneg %p219
        $region78: #{tpu_custom_call.1} parent=51 // pred_check_branch
          %1555 = sbr.rel (%p1553) target = $region80
        $region79: #{tpu_custom_call.1} parent=51 // pred_region
          %s1557 = ssub.s32 512, 512
          %1558 = vsyncadd %s1549, %s1557
          %s1559 = smul.addr %s28, 4
          %s1560 = smul.addr %s1559, 128
          %s1561 = scalar_lea.hbm %s8, %s1560
          %s1562 = sshll.u32 %s1552, 4
          %s1563 = int_to_ptr.vmem [resolvable:$true] %s1562
          %1568 = dma.vmem_to_hbm [thread:$0]  %s1563, 512, %s1561, %s1549, 256, 256, 16
        $region80: #{tpu_custom_call.1} parent=51 // pred_fallthru
          _
      $region52: #{tpu_custom_call.1} parent=5 // pred_fallthru
        _
      %p1569 = scmp.le.s32.totalorder 2, %s23
      // Predicated region
      $region81: #{tpu_custom_call.1} parent=5 // pred_check
        %p1570 = pneg %p1569
      $region82: #{tpu_custom_call.1} parent=5 // pred_check_branch
        %1572 = sbr.rel (%p1570) target = $region84
      $region83: #{tpu_custom_call.1} parent=5 // pred_region
        %s1573 = ssub.s32 %s23, 2
        // Predicated region
        $region85: #{tpu_custom_call.1} parent=83 // pred_check
          %p1574 = pneg %p225
        $region86: #{tpu_custom_call.1} parent=83 // pred_check_branch
          %1576 = sbr.rel (%p1574) target = $region88
        $region87: #{tpu_custom_call.1} parent=83 // pred_region
          %s1577 = sand.u32 %s210, 1
          %s1578 = scalar_lea.sflag [#allocation5], %s1577
          %s1579 = sand.u32 %s210, 1
          %s1580 = smul.addr %s1579, 32
          %s1581 = scalar_lea.vmem [#allocation14], %s1580
          %1582 = dma.done %s1578, 512
        $region88: #{tpu_custom_call.1} parent=83 // pred_fallthru
          _
      $region84: #{tpu_custom_call.1} parent=5 // pred_fallthru
        _
    $region6: #{tpu_custom_call.1} parent=1 // loop_footer
      %s27 = sadd.s32 1, %s23
    $region7: #{tpu_custom_call.1} parent=1 // loop_footer_branch
      %22 = sbr.rel target = $region3
    $region8: #{tpu_custom_call.1} parent=1 // loop_exit
      _
    %1583 = vsyncpa [#allocation4], 1
    %s1584 = scalar_lea.sflag [#allocation4], 1
    %1585 = vsyncpa %s1584, 1
    %1586 = vsyncpa [#allocation7], 1
    %1587 = vsyncpa [#allocation10], 1
    %1588 = vsyncpa [#allocation13], 1
    %1589 = vsyncpa [#allocation5], 1
    %s1590 = scalar_lea.sflag [#allocation5], 1
    %1591 = vsyncpa %s1590, 1

</llo_original>
